<compile_context>
chip_gen: v7x
topology: tpu7x:2x2x1
jax: 0.10.0
libtpu: 0.0.40
codegen_flags: <defaults>
</compile_context>

<pallas_src>
import jax
import jax.numpy as jnp
from jax.experimental import pallas as pl
from jax.experimental.pallas import tpu as pltpu


# ----------------------------- Pallas kernel ---------------------------------
def attn_decoder_kernel(
    emb_ref,      # [bm, E]          embedded tokens (bf16), dropout = identity (eval)
    h_ref,        # [bm, H]          previous hidden (bf16 matmul operand)
    xh_ref,       # [bm, E+H]        concat(embedded, h_prev) (bf16) -> fused gate matmul
    c_ref,        # [bm, H]          previous cell state (f32)
    enc_ref,      # [bm, S, 2*Eh]    encoder outputs, batch-major (bf16)
    wa_h_ref,     # [H, H]           attention weight, hidden part  (in x out, bf16)
    wa_e_ref,     # [2*Eh, H]        attention weight, encoder part (in x out, bf16)
    b_a_ref,      # [1, H]           attention bias (f32)
    v_ref,        # [1, H]           attention score vector (f32)
    w_xh_ref,     # [E+H, 4H]        fused LSTM weight: rows = [W_ih(emb part) ; W_hh] (bf16)
    wih_w_ref,    # [2*Eh, 4H]       LSTM W_ih, weighted-context part (bf16)
    b_lstm_ref,   # [1, 4H]          b_ih + b_hh (f32)
    wfc_o_ref,    # [H, O]           fc weight, lstm-output part (bf16)
    wfc_w_ref,    # [2*Eh, O]        fc weight, weighted-context part (bf16)
    wfc_e_ref,    # [E, O]           fc weight, embedded part (bf16)
    b_fc_ref,     # [1, O]           (f32)
    p_ref,        # out: [bm, O]     f32
    h_out_ref,    # out: [bm, H]     f32
    c_out_ref,    # out: [bm, H]     f32
):
    emb = emb_ref[...]                     # [bm, E]   bf16
    h = h_ref[...]                         # [bm, H]   bf16
    xh = xh_ref[...]                       # [bm, E+H] bf16
    c = c_ref[...]                         # [bm, H]   f32
    enc = enc_ref[...]                     # [bm, S, 2Eh] bf16

    bm, S, enc2 = enc.shape
    H = wa_h_ref.shape[0]

    # ---------------- Attention: softmax_s( v . tanh(Wa [h ; enc_s] + b) ) ----
    # Hidden projection with the bias folded in (one [bm,H] add instead of [bm,S,H]).
    hb = jnp.dot(h, wa_h_ref[...], preferred_element_type=jnp.float32) + b_a_ref[...]   # [bm, H]

    # Encoder projection as ONE 2-D bf16 matmul with f32 accumulation.
    enc_proj = jnp.dot(enc.reshape(bm * S, enc2), wa_e_ref[...],
                       preferred_element_type=jnp.float32).reshape(bm, S, H)            # [bm, S, H]

    energy = jnp.tanh(enc_proj + hb[:, None, :])                                        # [bm, S, H] f32
    scores = jnp.sum(energy * v_ref[...][None, :, :], axis=-1)                          # [bm, S]

    m = jnp.max(scores, axis=-1, keepdims=True)                                         # [bm, 1]
    exps = jnp.exp(scores - m)                                                          # [bm, S]
    denom = jnp.sum(exps, axis=-1, keepdims=True)                                       # [bm, 1]
    attn = exps / denom                                                                 # exact divide (tiny)

    # Context vector: f32 accumulation (bf16 enc promotes to f32 in the multiply).
    weighted = jnp.sum(attn[:, :, None] * enc, axis=1)                                  # [bm, 2Eh] f32
    weighted_c = weighted.astype(enc.dtype)                                             # bf16 matmul operand

    # ---------------- LSTM cell (1 step, 1 layer; PyTorch gate order i,f,g,o) --
    # Fused: [emb|h] @ [W_ih_emb ; W_hh]  +  weighted @ W_ih_w  -> only 2 MXU pushes.
    gates = (jnp.dot(xh, w_xh_ref[...], preferred_element_type=jnp.float32)
             + jnp.dot(weighted_c, wih_w_ref[...], preferred_element_type=jnp.float32)
             + b_lstm_ref[...])                                                         # [bm, 4H] f32
    i_g = jax.nn.sigmoid(gates[:, 0 * H:1 * H])
    f_g = jax.nn.sigmoid(gates[:, 1 * H:2 * H])
    g_g = jnp.tanh(gates[:, 2 * H:3 * H])
    o_g = jax.nn.sigmoid(gates[:, 3 * H:4 * H])
    c_new = f_g * c + i_g * g_g                                                         # f32 state
    h_new = o_g * jnp.tanh(c_new)                                                       # f32 state

    # ---------------- fc(cat(output, weighted, embedded)) ---------------------
    p = (jnp.dot(h_new.astype(enc.dtype), wfc_o_ref[...], preferred_element_type=jnp.float32)
         + jnp.dot(weighted_c, wfc_w_ref[...], preferred_element_type=jnp.float32)
         + jnp.dot(emb, wfc_e_ref[...], preferred_element_type=jnp.float32)
         + b_fc_ref[...])                                                               # [bm, O] f32

    p_ref[...] = p
    h_out_ref[...] = h_new
    c_out_ref[...] = c_new


# ------------------------------ wrapper ---------------------------------------
def attn_decoder_forward(x_tok, h, c, encoder_outputs, params, *, block_batch=None,
                         compute_dtype=jnp.bfloat16):
    """
    x_tok:            [B]            int32 token ids
    h, c:             [1, B, H]      (nlayers = 1)
    encoder_outputs:  [S, B, 2*Eh]   (PyTorch seq-major convention)
    returns (p [B, O], h_new [B, H], c_new [B, H])

    block_batch: None -> whole batch in one grid step (best on v5e/v6e single-TC);
                 on v7x pass roughly ceil(B/2) rounded to a multiple of 8 so megacore
                 can split the batch over the 2 TensorCores.
    """
    B = x_tok.shape[0]
    S, _, enc2 = encoder_outputs.shape
    H = h.shape[-1]
    O = params["b_fc"].shape[1]
    E = params["wfc_e"].shape[0]

    # Embedding gather (glue) + eval-mode dropout (identity).
    emb = jnp.take(params["embedding"], x_tok, axis=0).astype(compute_dtype)   # [B, E]
    h0 = h[0].astype(compute_dtype)                                            # [B, H]
    xh = jnp.concatenate([emb, h0], axis=1)                                    # [B, E+H]
    c0 = c[0].astype(jnp.float32)                                              # [B, H]

    # Batch-major + bf16 encoder: contiguous per-row DMA segments, half the HBM traffic.
    enc_bm = jnp.transpose(encoder_outputs.astype(compute_dtype), (1, 0, 2))   # [B, S, 2Eh]

    cast = lambda k: params[k].astype(compute_dtype)
    wa_h, wa_e = cast("wa_h"), cast("wa_e")
    w_xh, wih_w = cast("w_xh"), cast("wih_w")
    wfc_o, wfc_w, wfc_e = cast("wfc_o"), cast("wfc_w"), cast("wfc_e")

    # Batch tile: default = full batch (single grid step); cap at 256; keep multiple of 8.
    if block_batch is None:
        bm = B if B <= 256 else 256
    else:
        bm = min(block_batch, B)
    if bm != B:
        bm = max(8, (bm // 8) * 8)
    grid = (pl.cdiv(B, bm),)

    # Whole-array, grid-invariant weights stay resident in VMEM (no per-step DMA).
    vmem_full = pl.BlockSpec(memory_space=pltpu.MemorySpace.VMEM)
    in_specs = [
        pl.BlockSpec((bm, E), lambda i: (i, 0)),                 # emb
        pl.BlockSpec((bm, H), lambda i: (i, 0)),                 # h
        pl.BlockSpec((bm, E + H), lambda i: (i, 0)),             # xh (fused gate operand)
        pl.BlockSpec((bm, H), lambda i: (i, 0)),                 # c0
        pl.BlockSpec((bm, S, enc2), lambda i: (i, 0, 0)),        # enc (batch-major)
        vmem_full, vmem_full, vmem_full, vmem_full,              # wa_h, wa_e, b_a, v
        vmem_full, vmem_full, vmem_full,                         # w_xh, wih_w, b_lstm
        vmem_full, vmem_full, vmem_full, vmem_full,              # wfc_o, wfc_w, wfc_e, b_fc
    ]
    out_specs = (
        pl.BlockSpec((bm, O), lambda i: (i, 0)),
        pl.BlockSpec((bm, H), lambda i: (i, 0)),
        pl.BlockSpec((bm, H), lambda i: (i, 0)),
    )

    p, h_new, c_new = pl.pallas_call(
        attn_decoder_kernel,
        grid=grid,
        in_specs=in_specs,
        out_specs=out_specs,
        out_shape=(
            jax.ShapeDtypeStruct((B, O), jnp.float32),
            jax.ShapeDtypeStruct((B, H), jnp.float32),
            jax.ShapeDtypeStruct((B, H), jnp.float32),
        ),
        compiler_params=pltpu.CompilerParams(
            dimension_semantics=("parallel",),
            vmem_limit_bytes=48 * 1024 * 1024,   # above 16/32 MiB scoped defaults, headroom on v7x
        ),
    )(emb, h0, xh, c0, enc_bm,
      wa_h, wa_e, params["b_a"], params["v"],
      w_xh, wih_w, params["b_lstm"],
      wfc_o, wfc_w, wfc_e, params["b_fc"])
    return p, h_new, c_new


# --------------------------- params / reference --------------------------------
def make_params(key, output_dim, enc_hidden, dec_hidden, embed_dim):
    enc2 = 2 * enc_hidden

    def u(key, shape, scale):
        return jax.random.uniform(key, shape, jnp.float32, -scale, scale)

    ks = jax.random.split(key, 12)
    H, E, O = dec_hidden, embed_dim, output_dim

    # Attention: Linear(enc2 + H, H) split into [h-part | enc-part] (cat order (hidden, enc)),
    # and v: Linear(H, 1, bias=False). Weights stored pre-transposed (in x out).
    s_a = 1.0 / jnp.sqrt(enc2 + H)
    wa = u(ks[0], (H, enc2 + H), s_a)
    # LSTM: W_ih [4H, E + enc2] split into embedded / weighted parts, W_hh [4H, H].
    s_l = 1.0 / jnp.sqrt(H)
    wih = u(ks[1], (4 * H, E + enc2), s_l)
    whh = u(ks[2], (4 * H, H), s_l)
    b_ih = u(ks[3], (4 * H,), s_l)
    b_hh = u(ks[4], (4 * H,), s_l)
    # fc: Linear(enc2 + H + E, O) split matching cat(output, weighted, embedded).
    s_f = 1.0 / jnp.sqrt(enc2 + H + E)
    wfc = u(ks[5], (O, H + enc2 + E), s_f)

    wih_e_t = jnp.transpose(wih[:, :E])     # [E, 4H]
    whh_t = jnp.transpose(whh)              # [H, 4H]

    return {
        "embedding": jax.random.normal(ks[6], (O, E), jnp.float32),
        "wa_h": jnp.transpose(wa[:, :H]),                     # [H, H]
        "wa_e": jnp.transpose(wa[:, H:]),                     # [enc2, H]
        "b_a": u(ks[7], (1, H), s_a),
        "v": u(ks[8], (1, H), 1.0 / jnp.sqrt(H)),
        "w_xh": jnp.concatenate([wih_e_t, whh_t], axis=0),    # [E+H, 4H] fused gate weight
        "wih_w": jnp.transpose(wih[:, E:]),                   # [enc2, 4H]
        "b_lstm": (b_ih + b_hh)[None, :],                     # [1, 4H]
        "wfc_o": jnp.transpose(wfc[:, :H]),                   # [H, O]
        "wfc_w": jnp.transpose(wfc[:, H:H + enc2]),           # [enc2, O]
        "wfc_e": jnp.transpose(wfc[:, H + enc2:]),            # [E, O]
        "b_fc": u(ks[9], (1, O), s_f),
    }


def reference_forward(x_tok, h, c, enc, params, compute_dtype=jnp.bfloat16):
    """Plain-JAX reference following the same bf16-operand / f32-accumulation path."""
    f32 = jnp.float32
    emb = jnp.take(params["embedding"], x_tok, axis=0).astype(compute_dtype)
    h0 = h[0].astype(compute_dtype)
    c0 = c[0].astype(f32)
    enc_bm = jnp.transpose(enc, (1, 0, 2)).astype(compute_dtype)      # [B, S, 2Eh]

    wa_h = params["wa_h"].astype(compute_dtype)
    wa_e = params["wa_e"].astype(compute_dtype)
    w_xh = params["w_xh"].astype(compute_dtype)
    wih_w = params["wih_w"].astype(compute_dtype)
    wfc_o = params["wfc_o"].astype(compute_dtype)
    wfc_w = params["wfc_w"].astype(compute_dtype)
    wfc_e = params["wfc_e"].astype(compute_dtype)

    B, S, enc2 = enc_bm.shape
    H = h0.shape[-1]

    hb = jnp.dot(h0, wa_h, preferred_element_type=f32) + params["b_a"]
    enc_proj = jnp.dot(enc_bm.reshape(B * S, enc2), wa_e,
                       preferred_element_type=f32).reshape(B, S, H)
    energy = jnp.tanh(enc_proj + hb[:, None, :])
    scores = jnp.sum(energy * params["v"][None], axis=-1)
    a = jax.nn.softmax(scores, axis=-1)
    weighted = jnp.sum(a[:, :, None] * enc_bm, axis=1)
    weighted_c = weighted.astype(compute_dtype)

    xh = jnp.concatenate([emb, h0], axis=1)
    gates = (jnp.dot(xh, w_xh, preferred_element_type=f32)
             + jnp.dot(weighted_c, wih_w, preferred_element_type=f32)
             + params["b_lstm"])
    i_g = jax.nn.sigmoid(gates[:, :H]); f_g = jax.nn.sigmoid(gates[:, H:2 * H])
    g_g = jnp.tanh(gates[:, 2 * H:3 * H]); o_g = jax.nn.sigmoid(gates[:, 3 * H:])
    c_new = f_g * c0 + i_g * g_g
    h_new = o_g * jnp.tanh(c_new)
    p = (jnp.dot(h_new.astype(compute_dtype), wfc_o, preferred_element_type=f32)
         + jnp.dot(weighted_c, wfc_w, preferred_element_type=f32)
         + jnp.dot(emb, wfc_e, preferred_element_type=f32)
         + params["b_fc"])
    return p, h_new, c_new


if __name__ == "__main__":
    # Small deterministic problem: nlayers=1 (so squeeze(0) drops the layer axis).
    output_dim, enc_hidden, dec_hidden, embed_dim = 32, 16, 32, 16
    batch, seq = 8, 8

    key = jax.random.PRNGKey(0)
    kp, kx, kh, kc, ke = jax.random.split(key, 5)

    params = make_params(kp, output_dim, enc_hidden, dec_hidden, embed_dim)
    x_tok = jax.random.randint(kx, (batch,), 0, output_dim, dtype=jnp.int32)
    h = jax.random.normal(kh, (1, batch, dec_hidden), jnp.float32)
    c = jax.random.normal(kc, (1, batch, dec_hidden), jnp.float32)
    encoder_outputs = jax.random.normal(ke, (seq, batch, 2 * enc_hidden), jnp.float32)

    p, h_new, c_new = attn_decoder_forward(x_tok, h, c, encoder_outputs, params)
    jax.block_until_ready((p, h_new, c_new))

    # Silent correctness check against the same-precision plain-JAX reference.
    p_r, h_r, c_r = reference_forward(x_tok, h, c, encoder_outputs, params)
    assert jnp.allclose(p, p_r, atol=2e-3, rtol=2e-3), "p mismatch"
    assert jnp.allclose(h_new, h_r, atol=2e-3, rtol=2e-3), "h mismatch"
    assert jnp.allclose(c_new, c_r, atol=2e-3, rtol=2e-3), "c mismatch"

    print("KERNEL_OK")
</pallas_src>

<mosaic_0001>
module attributes {stable_mosaic.version = 11 : i64} {
  func.func @attn_decoder_kernel(%arg0: i32, %arg1: memref<8x16xbf16, #tpu.memory_space<vmem>>, %arg2: memref<8x32xbf16, #tpu.memory_space<vmem>>, %arg3: memref<8x48xbf16, #tpu.memory_space<vmem>>, %arg4: memref<8x32xf32, #tpu.memory_space<vmem>>, %arg5: memref<8x8x32xbf16, #tpu.memory_space<vmem>>, %arg6: memref<32x32xbf16, #tpu.memory_space<vmem>>, %arg7: memref<32x32xbf16, #tpu.memory_space<vmem>>, %arg8: memref<1x32xf32, #tpu.memory_space<vmem>>, %arg9: memref<1x32xf32, #tpu.memory_space<vmem>>, %arg10: memref<48x128xbf16, #tpu.memory_space<vmem>>, %arg11: memref<32x128xbf16, #tpu.memory_space<vmem>>, %arg12: memref<1x128xf32, #tpu.memory_space<vmem>>, %arg13: memref<32x32xbf16, #tpu.memory_space<vmem>>, %arg14: memref<32x32xbf16, #tpu.memory_space<vmem>>, %arg15: memref<16x32xbf16, #tpu.memory_space<vmem>>, %arg16: memref<1x32xf32, #tpu.memory_space<vmem>>, %arg17: memref<8x32xf32, #tpu.memory_space<vmem>>, %arg18: memref<8x32xf32, #tpu.memory_space<vmem>>, %arg19: memref<8x32xf32, #tpu.memory_space<vmem>>) attributes {dimension_semantics = [#tpu.dimension_semantics<parallel>], iteration_bounds = array<i64: 1>, scalar_prefetch = 0 : i64, scratch_operands = 0 : i64, tpu.core_type = #tpu.core_type<tc>, window_params = [{transform_indices = @transform_0, window_bounds = array<i64: 8, 16>}, {transform_indices = @transform_1, window_bounds = array<i64: 8, 32>}, {transform_indices = @transform_2, window_bounds = array<i64: 8, 48>}, {transform_indices = @transform_3, window_bounds = array<i64: 8, 32>}, {transform_indices = @transform_4, window_bounds = array<i64: 8, 8, 32>}, {pipeline_mode = #tpu.pipeline_mode<synchronous>, transform_indices = @transform_5, window_bounds = array<i64: 32, 32>}, {pipeline_mode = #tpu.pipeline_mode<synchronous>, transform_indices = @transform_6, window_bounds = array<i64: 32, 32>}, {pipeline_mode = #tpu.pipeline_mode<synchronous>, transform_indices = @transform_7, window_bounds = array<i64: 1, 32>}, {pipeline_mode = #tpu.pipeline_mode<synchronous>, transform_indices = @transform_8, window_bounds = array<i64: 1, 32>}, {pipeline_mode = #tpu.pipeline_mode<synchronous>, transform_indices = @transform_9, window_bounds = array<i64: 48, 128>}, {pipeline_mode = #tpu.pipeline_mode<synchronous>, transform_indices = @transform_10, window_bounds = array<i64: 32, 128>}, {pipeline_mode = #tpu.pipeline_mode<synchronous>, transform_indices = @transform_11, window_bounds = array<i64: 1, 128>}, {pipeline_mode = #tpu.pipeline_mode<synchronous>, transform_indices = @transform_12, window_bounds = array<i64: 32, 32>}, {pipeline_mode = #tpu.pipeline_mode<synchronous>, transform_indices = @transform_13, window_bounds = array<i64: 32, 32>}, {pipeline_mode = #tpu.pipeline_mode<synchronous>, transform_indices = @transform_14, window_bounds = array<i64: 16, 32>}, {pipeline_mode = #tpu.pipeline_mode<synchronous>, transform_indices = @transform_15, window_bounds = array<i64: 1, 32>}, {transform_indices = @transform_16, window_bounds = array<i64: 8, 32>}, {transform_indices = @transform_17, window_bounds = array<i64: 8, 32>}, {transform_indices = @transform_18, window_bounds = array<i64: 8, 32>}]} {
    %c0 = arith.constant 0 : index
    %c0_0 = arith.constant 0 : index
    %0 = vector.load %arg1[%c0, %c0_0] : memref<8x16xbf16, #tpu.memory_space<vmem>>, vector<8x16xbf16>
    %c0_1 = arith.constant 0 : index
    %c0_2 = arith.constant 0 : index
    %1 = vector.load %arg2[%c0_1, %c0_2] : memref<8x32xbf16, #tpu.memory_space<vmem>>, vector<8x32xbf16>
    %c0_3 = arith.constant 0 : index
    %c0_4 = arith.constant 0 : index
    %2 = vector.load %arg3[%c0_3, %c0_4] : memref<8x48xbf16, #tpu.memory_space<vmem>>, vector<8x48xbf16>
    %c0_5 = arith.constant 0 : index
    %c0_6 = arith.constant 0 : index
    %3 = vector.load %arg4[%c0_5, %c0_6] : memref<8x32xf32, #tpu.memory_space<vmem>>, vector<8x32xf32>
    %c0_7 = arith.constant 0 : index
    %c0_8 = arith.constant 0 : index
    %c0_9 = arith.constant 0 : index
    %4 = vector.load %arg5[%c0_7, %c0_8, %c0_9] : memref<8x8x32xbf16, #tpu.memory_space<vmem>>, vector<8x8x32xbf16>
    %c0_10 = arith.constant 0 : index
    %c0_11 = arith.constant 0 : index
    %5 = vector.load %arg6[%c0_10, %c0_11] : memref<32x32xbf16, #tpu.memory_space<vmem>>, vector<32x32xbf16>
    %cst = arith.constant dense<0.000000e+00> : vector<8x32xf32>
    %6 = tpu.matmul %1, %5, %cst {dimension_numbers = #tpu.dot_dimension_numbers<[1], [0], [0], [1], [0, 0, 1, 1], [], []>} : vector<8x32xbf16>, vector<32x32xbf16>, vector<8x32xf32> -> vector<8x32xf32>
    %c0_12 = arith.constant 0 : index
    %c0_13 = arith.constant 0 : index
    %7 = vector.load %arg8[%c0_12, %c0_13] : memref<1x32xf32, #tpu.memory_space<vmem>>, vector<1x32xf32>
    %8 = vector.broadcast %7 : vector<1x32xf32> to vector<8x32xf32>
    %9 = arith.addf %6, %8 : vector<8x32xf32>
    %10 = vector.shape_cast %4 : vector<8x8x32xbf16> to vector<64x32xbf16>
    %c0_14 = arith.constant 0 : index
    %c0_15 = arith.constant 0 : index
    %11 = vector.load %arg7[%c0_14, %c0_15] : memref<32x32xbf16, #tpu.memory_space<vmem>>, vector<32x32xbf16>
    %cst_16 = arith.constant dense<0.000000e+00> : vector<64x32xf32>
    %12 = tpu.matmul %10, %11, %cst_16 {dimension_numbers = #tpu.dot_dimension_numbers<[1], [0], [0], [1], [0, 0, 1, 1], [], []>} : vector<64x32xbf16>, vector<32x32xbf16>, vector<64x32xf32> -> vector<64x32xf32>
    %13 = vector.shape_cast %12 : vector<64x32xf32> to vector<8x8x32xf32>
    %14 = vector.shape_cast %9 : vector<8x32xf32> to vector<8x1x32xf32>
    %15 = vector.broadcast %14 : vector<8x1x32xf32> to vector<8x8x32xf32>
    %16 = arith.addf %13, %15 : vector<8x8x32xf32>
    %17 = math.tanh %16 : vector<8x8x32xf32>
    %c0_17 = arith.constant 0 : index
    %c0_18 = arith.constant 0 : index
    %18 = vector.load %arg9[%c0_17, %c0_18] : memref<1x32xf32, #tpu.memory_space<vmem>>, vector<1x32xf32>
    %19 = vector.shape_cast %18 : vector<1x32xf32> to vector<1x1x32xf32>
    %20 = vector.broadcast %19 : vector<1x1x32xf32> to vector<8x8x32xf32>
    %21 = arith.mulf %17, %20 : vector<8x8x32xf32>
    %cst_19 = arith.constant dense<0.000000e+00> : vector<8x8xf32>
    %22 = vector.multi_reduction <add>, %21, %cst_19 [2] : vector<8x8x32xf32> to vector<8x8xf32>
    %cst_20 = arith.constant dense<0xFF800000> : vector<8xf32>
    %23 = vector.multi_reduction <maximumf>, %22, %cst_20 [1] : vector<8x8xf32> to vector<8xf32>
    %24 = vector.shape_cast %23 : vector<8xf32> to vector<8x1xf32>
    %25 = vector.broadcast %24 : vector<8x1xf32> to vector<8x8xf32>
    %26 = arith.subf %22, %25 : vector<8x8xf32>
    %27 = math.exp %26 : vector<8x8xf32>
    %cst_21 = arith.constant dense<0.000000e+00> : vector<8xf32>
    %28 = vector.multi_reduction <add>, %27, %cst_21 [1] : vector<8x8xf32> to vector<8xf32>
    %29 = vector.shape_cast %28 : vector<8xf32> to vector<8x1xf32>
    %30 = vector.broadcast %29 : vector<8x1xf32> to vector<8x8xf32>
    %31 = arith.divf %27, %30 : vector<8x8xf32>
    %32 = vector.shape_cast %31 : vector<8x8xf32> to vector<8x8x1xf32>
    %33 = arith.extf %4 : vector<8x8x32xbf16> to vector<8x8x32xf32>
    %34 = vector.broadcast %32 : vector<8x8x1xf32> to vector<8x8x32xf32>
    %35 = arith.mulf %34, %33 : vector<8x8x32xf32>
    %cst_22 = arith.constant dense<0.000000e+00> : vector<8x32xf32>
    %36 = vector.multi_reduction <add>, %35, %cst_22 [1] : vector<8x8x32xf32> to vector<8x32xf32>
    %37 = arith.truncf %36 : vector<8x32xf32> to vector<8x32xbf16>
    %c0_23 = arith.constant 0 : index
    %c0_24 = arith.constant 0 : index
    %38 = vector.load %arg10[%c0_23, %c0_24] : memref<48x128xbf16, #tpu.memory_space<vmem>>, vector<48x128xbf16>
    %cst_25 = arith.constant dense<0.000000e+00> : vector<8x128xf32>
    %39 = tpu.matmul %2, %38, %cst_25 {dimension_numbers = #tpu.dot_dimension_numbers<[1], [0], [0], [1], [0, 0, 1, 1], [], []>} : vector<8x48xbf16>, vector<48x128xbf16>, vector<8x128xf32> -> vector<8x128xf32>
    %c0_26 = arith.constant 0 : index
    %c0_27 = arith.constant 0 : index
    %40 = vector.load %arg11[%c0_26, %c0_27] : memref<32x128xbf16, #tpu.memory_space<vmem>>, vector<32x128xbf16>
    %cst_28 = arith.constant dense<0.000000e+00> : vector<8x128xf32>
    %41 = tpu.matmul %37, %40, %cst_28 {dimension_numbers = #tpu.dot_dimension_numbers<[1], [0], [0], [1], [0, 0, 1, 1], [], []>} : vector<8x32xbf16>, vector<32x128xbf16>, vector<8x128xf32> -> vector<8x128xf32>
    %42 = arith.addf %39, %41 : vector<8x128xf32>
    %c0_29 = arith.constant 0 : index
    %c0_30 = arith.constant 0 : index
    %43 = vector.load %arg12[%c0_29, %c0_30] : memref<1x128xf32, #tpu.memory_space<vmem>>, vector<1x128xf32>
    %44 = vector.broadcast %43 : vector<1x128xf32> to vector<8x128xf32>
    %45 = arith.addf %42, %44 : vector<8x128xf32>
    %46 = vector.extract_strided_slice %45 {offsets = [0, 0], sizes = [8, 32], strides = [1, 1]} : vector<8x128xf32> to vector<8x32xf32>
    %47 = arith.negf %46 : vector<8x32xf32>
    %48 = math.exp %47 : vector<8x32xf32>
    %cst_31 = arith.constant 1.000000e+00 : f32
    %49 = vector.broadcast %cst_31 : f32 to vector<8x32xf32>
    %50 = arith.addf %49, %48 : vector<8x32xf32>
    %51 = arith.divf %49, %50 : vector<8x32xf32>
    %52 = vector.extract_strided_slice %45 {offsets = [0, 32], sizes = [8, 32], strides = [1, 1]} : vector<8x128xf32> to vector<8x32xf32>
    %53 = arith.negf %52 : vector<8x32xf32>
    %54 = math.exp %53 : vector<8x32xf32>
    %cst_32 = arith.constant 1.000000e+00 : f32
    %55 = vector.broadcast %cst_32 : f32 to vector<8x32xf32>
    %56 = arith.addf %55, %54 : vector<8x32xf32>
    %57 = arith.divf %55, %56 : vector<8x32xf32>
    %58 = vector.extract_strided_slice %45 {offsets = [0, 64], sizes = [8, 32], strides = [1, 1]} : vector<8x128xf32> to vector<8x32xf32>
    %59 = math.tanh %58 : vector<8x32xf32>
    %60 = vector.extract_strided_slice %45 {offsets = [0, 96], sizes = [8, 32], strides = [1, 1]} : vector<8x128xf32> to vector<8x32xf32>
    %61 = arith.negf %60 : vector<8x32xf32>
    %62 = math.exp %61 : vector<8x32xf32>
    %cst_33 = arith.constant 1.000000e+00 : f32
    %63 = vector.broadcast %cst_33 : f32 to vector<8x32xf32>
    %64 = arith.addf %63, %62 : vector<8x32xf32>
    %65 = arith.divf %63, %64 : vector<8x32xf32>
    %66 = arith.mulf %57, %3 : vector<8x32xf32>
    %67 = arith.mulf %51, %59 : vector<8x32xf32>
    %68 = arith.addf %66, %67 : vector<8x32xf32>
    %69 = math.tanh %68 : vector<8x32xf32>
    %70 = arith.mulf %65, %69 : vector<8x32xf32>
    %71 = arith.truncf %70 : vector<8x32xf32> to vector<8x32xbf16>
    %c0_34 = arith.constant 0 : index
    %c0_35 = arith.constant 0 : index
    %72 = vector.load %arg13[%c0_34, %c0_35] : memref<32x32xbf16, #tpu.memory_space<vmem>>, vector<32x32xbf16>
    %cst_36 = arith.constant dense<0.000000e+00> : vector<8x32xf32>
    %73 = tpu.matmul %71, %72, %cst_36 {dimension_numbers = #tpu.dot_dimension_numbers<[1], [0], [0], [1], [0, 0, 1, 1], [], []>} : vector<8x32xbf16>, vector<32x32xbf16>, vector<8x32xf32> -> vector<8x32xf32>
    %c0_37 = arith.constant 0 : index
    %c0_38 = arith.constant 0 : index
    %74 = vector.load %arg14[%c0_37, %c0_38] : memref<32x32xbf16, #tpu.memory_space<vmem>>, vector<32x32xbf16>
    %cst_39 = arith.constant dense<0.000000e+00> : vector<8x32xf32>
    %75 = tpu.matmul %37, %74, %cst_39 {dimension_numbers = #tpu.dot_dimension_numbers<[1], [0], [0], [1], [0, 0, 1, 1], [], []>} : vector<8x32xbf16>, vector<32x32xbf16>, vector<8x32xf32> -> vector<8x32xf32>
    %76 = arith.addf %73, %75 : vector<8x32xf32>
    %c0_40 = arith.constant 0 : index
    %c0_41 = arith.constant 0 : index
    %77 = vector.load %arg15[%c0_40, %c0_41] : memref<16x32xbf16, #tpu.memory_space<vmem>>, vector<16x32xbf16>
    %cst_42 = arith.constant dense<0.000000e+00> : vector<8x32xf32>
    %78 = tpu.matmul %0, %77, %cst_42 {dimension_numbers = #tpu.dot_dimension_numbers<[1], [0], [0], [1], [0, 0, 1, 1], [], []>} : vector<8x16xbf16>, vector<16x32xbf16>, vector<8x32xf32> -> vector<8x32xf32>
    %79 = arith.addf %76, %78 : vector<8x32xf32>
    %c0_43 = arith.constant 0 : index
    %c0_44 = arith.constant 0 : index
    %80 = vector.load %arg16[%c0_43, %c0_44] : memref<1x32xf32, #tpu.memory_space<vmem>>, vector<1x32xf32>
    %81 = vector.broadcast %80 : vector<1x32xf32> to vector<8x32xf32>
    %82 = arith.addf %79, %81 : vector<8x32xf32>
    %c0_45 = arith.constant 0 : index
    %c0_46 = arith.constant 0 : index
    %83 = vector.load %arg17[%c0_45, %c0_46] : memref<8x32xf32, #tpu.memory_space<vmem>>, vector<8x32xf32>
    tpu.vector_store %arg17[%c0_45, %c0_46], %82 {strides = array<i32>} : memref<8x32xf32, #tpu.memory_space<vmem>>, vector<8x32xf32>,
    %c0_47 = arith.constant 0 : index
    %c0_48 = arith.constant 0 : index
    %84 = vector.load %arg18[%c0_47, %c0_48] : memref<8x32xf32, #tpu.memory_space<vmem>>, vector<8x32xf32>
    tpu.vector_store %arg18[%c0_47, %c0_48], %70 {strides = array<i32>} : memref<8x32xf32, #tpu.memory_space<vmem>>, vector<8x32xf32>,
    %c0_49 = arith.constant 0 : index
    %c0_50 = arith.constant 0 : index
    %85 = vector.load %arg19[%c0_49, %c0_50] : memref<8x32xf32, #tpu.memory_space<vmem>>, vector<8x32xf32>
    tpu.vector_store %arg19[%c0_49, %c0_50], %68 {strides = array<i32>} : memref<8x32xf32, #tpu.memory_space<vmem>>, vector<8x32xf32>,
    return
  }
  func.func @transform_0(%arg0: i32) -> (i32, i32) {
    %c0_i32 = arith.constant 0 : i32
    %c0_i32_0 = arith.constant 0 : i32
    return %arg0, %c0_i32 : i32, i32
  }
  func.func @transform_1(%arg0: i32) -> (i32, i32) {
    %c0_i32 = arith.constant 0 : i32
    %c0_i32_0 = arith.constant 0 : i32
    return %arg0, %c0_i32 : i32, i32
  }
  func.func @transform_2(%arg0: i32) -> (i32, i32) {
    %c0_i32 = arith.constant 0 : i32
    %c0_i32_0 = arith.constant 0 : i32
    return %arg0, %c0_i32 : i32, i32
  }
  func.func @transform_3(%arg0: i32) -> (i32, i32) {
    %c0_i32 = arith.constant 0 : i32
    %c0_i32_0 = arith.constant 0 : i32
    return %arg0, %c0_i32 : i32, i32
  }
  func.func @transform_4(%arg0: i32) -> (i32, i32, i32) {
    %c0_i32 = arith.constant 0 : i32
    %c0_i32_0 = arith.constant 0 : i32
    %c0_i32_1 = arith.constant 0 : i32
    return %arg0, %c0_i32, %c0_i32_0 : i32, i32, i32
  }
  func.func @transform_5(%arg0: i32) -> (i32, i32) {
    %c0_i32 = arith.constant 0 : i32
    %c0_i32_0 = arith.constant 0 : i32
    %c0_i32_1 = arith.constant 0 : i32
    return %c0_i32, %c0_i32_0 : i32, i32
  }
  func.func @transform_6(%arg0: i32) -> (i32, i32) {
    %c0_i32 = arith.constant 0 : i32
    %c0_i32_0 = arith.constant 0 : i32
    %c0_i32_1 = arith.constant 0 : i32
    return %c0_i32, %c0_i32_0 : i32, i32
  }
  func.func @transform_7(%arg0: i32) -> (i32, i32) {
    %c0_i32 = arith.constant 0 : i32
    %c0_i32_0 = arith.constant 0 : i32
    %c0_i32_1 = arith.constant 0 : i32
    return %c0_i32, %c0_i32_0 : i32, i32
  }
  func.func @transform_8(%arg0: i32) -> (i32, i32) {
    %c0_i32 = arith.constant 0 : i32
    %c0_i32_0 = arith.constant 0 : i32
    %c0_i32_1 = arith.constant 0 : i32
    return %c0_i32, %c0_i32_0 : i32, i32
  }
  func.func @transform_9(%arg0: i32) -> (i32, i32) {
    %c0_i32 = arith.constant 0 : i32
    %c0_i32_0 = arith.constant 0 : i32
    %c0_i32_1 = arith.constant 0 : i32
    return %c0_i32, %c0_i32_0 : i32, i32
  }
  func.func @transform_10(%arg0: i32) -> (i32, i32) {
    %c0_i32 = arith.constant 0 : i32
    %c0_i32_0 = arith.constant 0 : i32
    %c0_i32_1 = arith.constant 0 : i32
    return %c0_i32, %c0_i32_0 : i32, i32
  }
  func.func @transform_11(%arg0: i32) -> (i32, i32) {
    %c0_i32 = arith.constant 0 : i32
    %c0_i32_0 = arith.constant 0 : i32
    %c0_i32_1 = arith.constant 0 : i32
    return %c0_i32, %c0_i32_0 : i32, i32
  }
  func.func @transform_12(%arg0: i32) -> (i32, i32) {
    %c0_i32 = arith.constant 0 : i32
    %c0_i32_0 = arith.constant 0 : i32
    %c0_i32_1 = arith.constant 0 : i32
    return %c0_i32, %c0_i32_0 : i32, i32
  }
  func.func @transform_13(%arg0: i32) -> (i32, i32) {
    %c0_i32 = arith.constant 0 : i32
    %c0_i32_0 = arith.constant 0 : i32
    %c0_i32_1 = arith.constant 0 : i32
    return %c0_i32, %c0_i32_0 : i32, i32
  }
  func.func @transform_14(%arg0: i32) -> (i32, i32) {
    %c0_i32 = arith.constant 0 : i32
    %c0_i32_0 = arith.constant 0 : i32
    %c0_i32_1 = arith.constant 0 : i32
    return %c0_i32, %c0_i32_0 : i32, i32
  }
  func.func @transform_15(%arg0: i32) -> (i32, i32) {
    %c0_i32 = arith.constant 0 : i32
    %c0_i32_0 = arith.constant 0 : i32
    %c0_i32_1 = arith.constant 0 : i32
    return %c0_i32, %c0_i32_0 : i32, i32
  }
  func.func @transform_16(%arg0: i32) -> (i32, i32) {
    %c0_i32 = arith.constant 0 : i32
    %c0_i32_0 = arith.constant 0 : i32
    return %arg0, %c0_i32 : i32, i32
  }
  func.func @transform_17(%arg0: i32) -> (i32, i32) {
    %c0_i32 = arith.constant 0 : i32
    %c0_i32_0 = arith.constant 0 : i32
    return %arg0, %c0_i32 : i32, i32
  }
  func.func @transform_18(%arg0: i32) -> (i32, i32) {
    %c0_i32 = arith.constant 0 : i32
    %c0_i32_0 = arith.constant 0 : i32
    return %arg0, %c0_i32 : i32, i32
  }
}

</mosaic_0001>

<llo_original>
// kernel: tpu_custom_call.1
$region0: #{tpu_custom_call.1}
  #allocation0 [shape = 'u32[]', space=smem, size = 0x4, offset = 0x4, fixed_abs, tag = 'smem constant byte address 0x4 - core index']
  #allocation1 [shape = 'u32[144,128]{1,0:T(1,128)}', space=vmem, size = 0x12000, scoped, tag = 'internal scratch']
  %s0 = inlined_call_operand.hbm [shape: bf16[8,16], index: 0, kind: input, shape index: {}]
  %s1 = inlined_call_operand.hbm [shape: bf16[8,32], index: 1, kind: input, shape index: {}]
  %s2 = inlined_call_operand.hbm [shape: bf16[8,48], index: 2, kind: input, shape index: {}]
  %s3 = inlined_call_operand.hbm [shape: f32[8,32], index: 3, kind: input, shape index: {}]
  %s4 = inlined_call_operand.hbm [shape: bf16[8,8,32], index: 4, kind: input, shape index: {}]
  %s5 = inlined_call_operand.hbm [shape: bf16[32,32], index: 5, kind: input, shape index: {}]
  %s6 = inlined_call_operand.hbm [shape: bf16[32,32], index: 6, kind: input, shape index: {}]
  %s7 = inlined_call_operand.vmem [shape: f32[1,32], index: 7, kind: input, shape index: {}]
  %s8 = inlined_call_operand.hbm [shape: f32[1,32], index: 8, kind: input, shape index: {}]
  %s9 = inlined_call_operand.vmem [shape: bf16[48,128], index: 9, kind: input, shape index: {}]
  %s10 = inlined_call_operand.hbm [shape: bf16[32,128], index: 10, kind: input, shape index: {}]
  %s11 = inlined_call_operand.hbm [shape: f32[1,128], index: 11, kind: input, shape index: {}]
  %s12 = inlined_call_operand.vmem [shape: bf16[32,32], index: 12, kind: input, shape index: {}]
  %s13 = inlined_call_operand.hbm [shape: bf16[32,32], index: 13, kind: input, shape index: {}]
  %s14 = inlined_call_operand.vmem [shape: bf16[16,32], index: 14, kind: input, shape index: {}]
  %s15 = inlined_call_operand.vmem [shape: f32[1,32], index: 15, kind: input, shape index: {}]
  %s16 = inlined_call_operand.hbm [shape: f32[8,32], index: 16, kind: output, shape index: {0}]
  %s17 = inlined_call_operand.hbm [shape: f32[8,32], index: 17, kind: output, shape index: {1}]
  %s18 = inlined_call_operand.hbm [shape: f32[8,32], index: 18, kind: output, shape index: {2}]
  %19 = xla_tuple %s16, %s17, %s18
  %s20 = sld [smem:[#allocation0]]
  $region134: #{tpu_custom_call.1} parent=0
    _
  %s22 = ssub.s32 1, %s20
  %s23 = scalar_select 0, %s22, %s20
  $region1: #{tpu_custom_call.1} parent=0
    #allocation2 [shape = 'u8[2048]{0}', space=vmem, size = 0x800, scoped, tag = 'input window, operand 0, single buffered']
    #allocation3 [shape = 's32[1]{0}', space=sflag, size = 0x4, scoped, tag = 'scoped memory for tpu_custom_call.1']
    #allocation4 [shape = 's32[1]{0}', space=sflag, size = 0x4, scoped, tag = 'scoped memory for tpu_custom_call.1']
    #allocation5 [shape = 'u8[2048]{0}', space=vmem, size = 0x800, scoped, tag = 'input window, operand 1, single buffered']
    #allocation6 [shape = 's32[1]{0}', space=sflag, size = 0x4, scoped, tag = 'scoped memory for tpu_custom_call.1']
    #allocation7 [shape = 'u8[2048]{0}', space=vmem, size = 0x800, scoped, tag = 'input window, operand 2, single buffered']
    #allocation8 [shape = 'u8[4096]{0}', space=vmem, size = 0x1000, scoped, tag = 'input window, operand 3, single buffered']
    #allocation9 [shape = 's32[1]{0}', space=sflag, size = 0x4, scoped, tag = 'scoped memory for tpu_custom_call.1']
    #allocation10 [shape = 'u8[16384]{0}', space=vmem, size = 0x4000, scoped, tag = 'input window, operand 4, single buffered']
    #allocation11 [shape = 'u8[8192]{0}', space=vmem, size = 0x2000, scoped, tag = 'input window, operand 5, single buffered']
    #allocation12 [shape = 's32[1]{0}', space=sflag, size = 0x4, scoped, tag = 'scoped memory for tpu_custom_call.1']
    #allocation13 [shape = 'u8[8192]{0}', space=vmem, size = 0x2000, scoped, tag = 'input window, operand 6, single buffered']
    #allocation14 [shape = 'u8[512]{0}', space=vmem, size = 0x400, scoped, tag = 'input window, operand 8, single buffered']
    #allocation15 [shape = 's32[1]{0}', space=sflag, size = 0x4, scoped, tag = 'scoped memory for tpu_custom_call.1']
    #allocation16 [shape = 'u8[8192]{0}', space=vmem, size = 0x2000, scoped, tag = 'input window, operand 10, single buffered']
    #allocation17 [shape = 'u8[512]{0}', space=vmem, size = 0x400, scoped, tag = 'input window, operand 11, single buffered']
    #allocation18 [shape = 's32[1]{0}', space=sflag, size = 0x4, scoped, tag = 'scoped memory for tpu_custom_call.1']
    #allocation19 [shape = 'u8[8192]{0}', space=vmem, size = 0x2000, scoped, tag = 'input window, operand 13, single buffered']
    #allocation20 [shape = 'u8[4096]{0}', space=vmem, size = 0x1000, scoped, tag = 'output window, operand 0, single buffered']
    #allocation21 [shape = 'u8[4096]{0}', space=vmem, size = 0x1000, scoped, tag = 'output window, operand 1, single buffered']
    #allocation22 [shape = 's32[1]{0}', space=sflag, size = 0x4, scoped, tag = 'scoped memory for tpu_custom_call.1']
    #allocation23 [shape = 'u8[4096]{0}', space=vmem, size = 0x1000, scoped, tag = 'output window, operand 2, single buffered']
    %24 = vsyncpa [#allocation3], 0
    %25 = vsyncpa [#allocation6], 0
    %26 = vsyncpa [#allocation9], 0
    %27 = vsyncpa [#allocation12], 0
    %28 = vsyncpa [#allocation15], 0
    %29 = vsyncpa [#allocation18], 0
    %30 = vsyncpa [#allocation4], 0
    %31 = vsyncpa [#allocation22], 0
    // Predicated region
    $region2: #{tpu_custom_call.1} parent=1 // pred_check
      _
    $region3: #{tpu_custom_call.1} parent=1 // pred_check_branch
      %33 = sbr.rel (0) target = $region5
    $region4: #{tpu_custom_call.1} parent=1 // pred_region
      %s35 = ssub.s32 64, 64
      %36 = vsyncadd [#allocation3], %s35
      %s38 = sshll.u32 [#allocation2], 4
      %s39 = int_to_ptr.vmem [resolvable:$true] %s38
      %41 = dma.hbm_to_vmem [thread:$0]  %s0, 64, %s39, [#allocation3]
    $region5: #{tpu_custom_call.1} parent=1 // pred_fallthru
      _
    // Predicated region
    $region6: #{tpu_custom_call.1} parent=1 // pred_check
      _
    $region7: #{tpu_custom_call.1} parent=1 // pred_check_branch
      %43 = sbr.rel (0) target = $region9
    $region8: #{tpu_custom_call.1} parent=1 // pred_region
      %s45 = ssub.s32 64, 64
      %46 = vsyncadd [#allocation6], %s45
      %s48 = sshll.u32 [#allocation5], 4
      %s49 = int_to_ptr.vmem [resolvable:$true] %s48
      %51 = dma.hbm_to_vmem [thread:$0]  %s1, 64, %s49, [#allocation6]
    $region9: #{tpu_custom_call.1} parent=1 // pred_fallthru
      _
    // Predicated region
    $region10: #{tpu_custom_call.1} parent=1 // pred_check
      _
    $region11: #{tpu_custom_call.1} parent=1 // pred_check_branch
      %53 = sbr.rel (0) target = $region13
    $region12: #{tpu_custom_call.1} parent=1 // pred_region
      %s55 = ssub.s32 64, 64
      %56 = vsyncadd [#allocation6], %s55
      %s58 = sshll.u32 [#allocation7], 4
      %s59 = int_to_ptr.vmem [resolvable:$true] %s58
      %61 = dma.hbm_to_vmem [thread:$0]  %s2, 64, %s59, [#allocation6]
    $region13: #{tpu_custom_call.1} parent=1 // pred_fallthru
      _
    // Predicated region
    $region14: #{tpu_custom_call.1} parent=1 // pred_check
      _
    $region15: #{tpu_custom_call.1} parent=1 // pred_check_branch
      %63 = sbr.rel (0) target = $region17
    $region16: #{tpu_custom_call.1} parent=1 // pred_region
      %s65 = ssub.s32 128, 128
      %66 = vsyncadd [#allocation9], %s65
      %s68 = sshll.u32 [#allocation8], 4
      %s69 = int_to_ptr.vmem [resolvable:$true] %s68
      %71 = dma.hbm_to_vmem [thread:$0]  %s3, 128, %s69, [#allocation9]
    $region17: #{tpu_custom_call.1} parent=1 // pred_fallthru
      _
    // Predicated region
    $region18: #{tpu_custom_call.1} parent=1 // pred_check
      _
    $region19: #{tpu_custom_call.1} parent=1 // pred_check_branch
      %73 = sbr.rel (0) target = $region21
    $region20: #{tpu_custom_call.1} parent=1 // pred_region
      %s75 = ssub.s32 512, 512
      %76 = vsyncadd [#allocation9], %s75
      %s77 = sshll.u32 [#allocation10], 4
      %s78 = int_to_ptr.vmem [resolvable:$true] %s77
      %83 = dma.hbm_to_vmem [thread:$0]  %s4, 512, %s78, [#allocation9], 64, 64, 4
    $region21: #{tpu_custom_call.1} parent=1 // pred_fallthru
      _
    // Predicated region
    $region22: #{tpu_custom_call.1} parent=1 // pred_check
      _
    $region23: #{tpu_custom_call.1} parent=1 // pred_check_branch
      %85 = sbr.rel (0) target = $region25
    $region24: #{tpu_custom_call.1} parent=1 // pred_region
      %s87 = ssub.s32 256, 256
      %88 = vsyncadd [#allocation12], %s87
      %s89 = sshll.u32 [#allocation11], 4
      %s90 = int_to_ptr.vmem [resolvable:$true] %s89
      %95 = dma.hbm_to_vmem [thread:$0]  %s5, 256, %s90, [#allocation12], 64, 64, 4
    $region25: #{tpu_custom_call.1} parent=1 // pred_fallthru
      _
    // Predicated region
    $region26: #{tpu_custom_call.1} parent=1 // pred_check
      _
    $region27: #{tpu_custom_call.1} parent=1 // pred_check_branch
      %97 = sbr.rel (0) target = $region29
    $region28: #{tpu_custom_call.1} parent=1 // pred_region
      %s99 = ssub.s32 256, 256
      %100 = vsyncadd [#allocation12], %s99
      %s101 = sshll.u32 [#allocation13], 4
      %s102 = int_to_ptr.vmem [resolvable:$true] %s101
      %107 = dma.hbm_to_vmem [thread:$0]  %s6, 256, %s102, [#allocation12], 64, 64, 4
    $region29: #{tpu_custom_call.1} parent=1 // pred_fallthru
      _
    // Predicated region
    $region30: #{tpu_custom_call.1} parent=1 // pred_check
      _
    $region31: #{tpu_custom_call.1} parent=1 // pred_check_branch
      %109 = sbr.rel (0) target = $region33
    $region32: #{tpu_custom_call.1} parent=1 // pred_region
      _
    $region33: #{tpu_custom_call.1} parent=1 // pred_fallthru
      _
    // Predicated region
    $region34: #{tpu_custom_call.1} parent=1 // pred_check
      _
    $region35: #{tpu_custom_call.1} parent=1 // pred_check_branch
      %111 = sbr.rel (0) target = $region37
    $region36: #{tpu_custom_call.1} parent=1 // pred_region
      %s113 = ssub.s32 16, 16
      %114 = vsyncadd [#allocation15], %s113
      %s116 = sshll.u32 [#allocation14], 4
      %s117 = int_to_ptr.vmem [resolvable:$true] %s116
      %119 = dma.hbm_to_vmem [thread:$0]  %s8, 16, %s117, [#allocation15]
    $region37: #{tpu_custom_call.1} parent=1 // pred_fallthru
      _
    // Predicated region
    $region38: #{tpu_custom_call.1} parent=1 // pred_check
      _
    $region39: #{tpu_custom_call.1} parent=1 // pred_check_branch
      %121 = sbr.rel (0) target = $region41
    $region40: #{tpu_custom_call.1} parent=1 // pred_region
      _
    $region41: #{tpu_custom_call.1} parent=1 // pred_fallthru
      _
    // Predicated region
    $region42: #{tpu_custom_call.1} parent=1 // pred_check
      _
    $region43: #{tpu_custom_call.1} parent=1 // pred_check_branch
      %123 = sbr.rel (0) target = $region45
    $region44: #{tpu_custom_call.1} parent=1 // pred_region
      %s125 = ssub.s32 256, 256
      %126 = vsyncadd [#allocation15], %s125
      %s127 = sshll.u32 [#allocation16], 4
      %s128 = int_to_ptr.vmem [resolvable:$true] %s127
      %133 = dma.hbm_to_vmem [thread:$0]  %s10, 256, %s128, [#allocation15], 64, 64, 4
    $region45: #{tpu_custom_call.1} parent=1 // pred_fallthru
      _
    // Predicated region
    $region46: #{tpu_custom_call.1} parent=1 // pred_check
      _
    $region47: #{tpu_custom_call.1} parent=1 // pred_check_branch
      %135 = sbr.rel (0) target = $region49
    $region48: #{tpu_custom_call.1} parent=1 // pred_region
      %s137 = ssub.s32 16, 16
      %138 = vsyncadd [#allocation18], %s137
      %s140 = sshll.u32 [#allocation17], 4
      %s141 = int_to_ptr.vmem [resolvable:$true] %s140
      %143 = dma.hbm_to_vmem [thread:$0]  %s11, 16, %s141, [#allocation18]
    $region49: #{tpu_custom_call.1} parent=1 // pred_fallthru
      _
    // Predicated region
    $region50: #{tpu_custom_call.1} parent=1 // pred_check
      _
    $region51: #{tpu_custom_call.1} parent=1 // pred_check_branch
      %145 = sbr.rel (0) target = $region53
    $region52: #{tpu_custom_call.1} parent=1 // pred_region
      _
    $region53: #{tpu_custom_call.1} parent=1 // pred_fallthru
      _
    // Predicated region
    $region54: #{tpu_custom_call.1} parent=1 // pred_check
      _
    $region55: #{tpu_custom_call.1} parent=1 // pred_check_branch
      %147 = sbr.rel (0) target = $region57
    $region56: #{tpu_custom_call.1} parent=1 // pred_region
      %s149 = ssub.s32 256, 256
      %150 = vsyncadd [#allocation18], %s149
      %s151 = sshll.u32 [#allocation19], 4
      %s152 = int_to_ptr.vmem [resolvable:$true] %s151
      %157 = dma.hbm_to_vmem [thread:$0]  %s13, 256, %s152, [#allocation18], 64, 64, 4
    $region57: #{tpu_custom_call.1} parent=1 // pred_fallthru
      _
    // Predicated region
    $region58: #{tpu_custom_call.1} parent=1 // pred_check
      _
    $region59: #{tpu_custom_call.1} parent=1 // pred_check_branch
      %159 = sbr.rel (0) target = $region61
    $region60: #{tpu_custom_call.1} parent=1 // pred_region
      _
    $region61: #{tpu_custom_call.1} parent=1 // pred_fallthru
      _
    // Predicated region
    $region62: #{tpu_custom_call.1} parent=1 // pred_check
      _
    $region63: #{tpu_custom_call.1} parent=1 // pred_check_branch
      %161 = sbr.rel (0) target = $region65
    $region64: #{tpu_custom_call.1} parent=1 // pred_region
      _
    $region65: #{tpu_custom_call.1} parent=1 // pred_fallthru
      _
    // Predicated region
    $region66: #{tpu_custom_call.1} parent=1 // pred_check
      _
    $region67: #{tpu_custom_call.1} parent=1 // pred_check_branch
      %163 = sbr.rel (0) target = $region69
    $region68: #{tpu_custom_call.1} parent=1 // pred_region
      %164 = dma.done [#allocation3], 64
    $region69: #{tpu_custom_call.1} parent=1 // pred_fallthru
      _
    // Predicated region
    $region70: #{tpu_custom_call.1} parent=1 // pred_check
      _
    $region71: #{tpu_custom_call.1} parent=1 // pred_check_branch
      %166 = sbr.rel (0) target = $region73
    $region72: #{tpu_custom_call.1} parent=1 // pred_region
      %167 = dma.done [#allocation6], 64
    $region73: #{tpu_custom_call.1} parent=1 // pred_fallthru
      _
    // Predicated region
    $region74: #{tpu_custom_call.1} parent=1 // pred_check
      _
    $region75: #{tpu_custom_call.1} parent=1 // pred_check_branch
      %169 = sbr.rel (0) target = $region77
    $region76: #{tpu_custom_call.1} parent=1 // pred_region
      %170 = dma.done [#allocation6], 64
    $region77: #{tpu_custom_call.1} parent=1 // pred_fallthru
      _
    // Predicated region
    $region78: #{tpu_custom_call.1} parent=1 // pred_check
      _
    $region79: #{tpu_custom_call.1} parent=1 // pred_check_branch
      %172 = sbr.rel (0) target = $region81
    $region80: #{tpu_custom_call.1} parent=1 // pred_region
      %173 = dma.done [#allocation9], 128
    $region81: #{tpu_custom_call.1} parent=1 // pred_fallthru
      _
    // Predicated region
    $region82: #{tpu_custom_call.1} parent=1 // pred_check
      _
    $region83: #{tpu_custom_call.1} parent=1 // pred_check_branch
      %175 = sbr.rel (0) target = $region85
    $region84: #{tpu_custom_call.1} parent=1 // pred_region
      %176 = dma.done [#allocation9], 512
    $region85: #{tpu_custom_call.1} parent=1 // pred_fallthru
      _
    // Predicated region
    $region86: #{tpu_custom_call.1} parent=1 // pred_check
      _
    $region87: #{tpu_custom_call.1} parent=1 // pred_check_branch
      %178 = sbr.rel (0) target = $region89
    $region88: #{tpu_custom_call.1} parent=1 // pred_region
      %179 = dma.done [#allocation12], 256
    $region89: #{tpu_custom_call.1} parent=1 // pred_fallthru
      _
    // Predicated region
    $region90: #{tpu_custom_call.1} parent=1 // pred_check
      _
    $region91: #{tpu_custom_call.1} parent=1 // pred_check_branch
      %181 = sbr.rel (0) target = $region93
    $region92: #{tpu_custom_call.1} parent=1 // pred_region
      %182 = dma.done [#allocation12], 256
    $region93: #{tpu_custom_call.1} parent=1 // pred_fallthru
      _
    // Predicated region
    $region94: #{tpu_custom_call.1} parent=1 // pred_check
      _
    $region95: #{tpu_custom_call.1} parent=1 // pred_check_branch
      %184 = sbr.rel (0) target = $region97
    $region96: #{tpu_custom_call.1} parent=1 // pred_region
      %185 = dma.done [#allocation15], 16
    $region97: #{tpu_custom_call.1} parent=1 // pred_fallthru
      _
    // Predicated region
    $region98: #{tpu_custom_call.1} parent=1 // pred_check
      _
    $region99: #{tpu_custom_call.1} parent=1 // pred_check_branch
      %187 = sbr.rel (0) target = $region101
    $region100: #{tpu_custom_call.1} parent=1 // pred_region
      %188 = dma.done [#allocation15], 256
    $region101: #{tpu_custom_call.1} parent=1 // pred_fallthru
      _
    // Predicated region
    $region102: #{tpu_custom_call.1} parent=1 // pred_check
      _
    $region103: #{tpu_custom_call.1} parent=1 // pred_check_branch
      %190 = sbr.rel (0) target = $region105
    $region104: #{tpu_custom_call.1} parent=1 // pred_region
      %191 = dma.done [#allocation18], 16
    $region105: #{tpu_custom_call.1} parent=1 // pred_fallthru
      _
    // Predicated region
    $region106: #{tpu_custom_call.1} parent=1 // pred_check
      _
    $region107: #{tpu_custom_call.1} parent=1 // pred_check_branch
      %193 = sbr.rel (0) target = $region109
    $region108: #{tpu_custom_call.1} parent=1 // pred_region
      %194 = dma.done [#allocation18], 256
    $region109: #{tpu_custom_call.1} parent=1 // pred_fallthru
      _
    %v196 = vld [vmem:[#allocation2] sm:$0xf]
    %v197 = vld [vmem:[#allocation5] sm:$0xf]
    %v198 = vld [vmem:[#allocation7] sm:$0xf]
    %v199 = vld [vmem:[#allocation8] sm:$0xff]
    %v200 = vld [vmem:[#allocation10] sm:$0xf]
    %v201 = vld [vmem:[#allocation10 + $0x4] sm:$0xf]
    %v202 = vld [vmem:[#allocation10 + $0x8] sm:$0xf]
    %v203 = vld [vmem:[#allocation10 + $0xc] sm:$0xf]
    %v204 = vld [vmem:[#allocation10 + $0x10] sm:$0xf]
    %v205 = vld [vmem:[#allocation10 + $0x14] sm:$0xf]
    %v206 = vld [vmem:[#allocation10 + $0x18] sm:$0xf]
    %v207 = vld [vmem:[#allocation10 + $0x1c] sm:$0xf]
    %v208 = vld [vmem:[#allocation11] sm:$0xf]
    %v209 = vld [vmem:[#allocation11 + $0x4] sm:$0xf]
    %v210 = vld [vmem:[#allocation11 + $0x8] sm:$0xf]
    %v211 = vld [vmem:[#allocation11 + $0xc] sm:$0xf]
    %v212 = vld [vmem:[%s7] sm:$0x1]
    %v214 = vlaneseq
    %v215 = vshrl.u32 %v214, 7
    %v216 = vsub.s32 0, %v215
    %v217 = vrot.slane %v212, %v216
    %v223 = vunpack.c.l.b16 %v208
    %v224 = vunpack.c.l.b16 %v209
    %v225 = vunpack.c.l.b16 %v210
    %v226 = vunpack.c.l.b16 %v211
    %v227 = vpack.c.b16 %v224, %v223
    %v228 = vpack.c.b16 %v226, %v225
    %vm231 = vcmask 261120
    %v233 = vsel %vm231, %v197, 0
    %235 = vmatprep.subr.bf16.mxu0 0
    %236 = vmatpush1.bf16.msra.mxu0 %v227
    %237 = vmatprep.subr.bf16.mxu0 0
    %238 = vmatpush1.bf16.msra.mxu0 %v228
    %239 = vmatprep.subr.bf16.mxu0 0
    %240 = vmatpush1.bf16.msra.mxu0 0
    %241 = vmatprep.subr.bf16.mxu0 0
    %242 = vmatpush1.bf16.msra.mxu0 0
    %243 = vmatprep.subr.bf16.mxu0 0
    %244 = vmatpush1.bf16.msra.mxu0 0
    %245 = vmatprep.subr.bf16.mxu0 0
    %246 = vmatpush1.bf16.msra.mxu0 0
    %247 = vmatprep.subr.bf16.mxu0 0
    %248 = vmatpush1.bf16.msra.mxu0 0
    %249 = vmatprep.subr.bf16.mxu0 0
    %250 = vmatpush1.bf16.msra.mxu0 0
    %251 = vmatprep.subr.bf16.mxu0 0
    %252 = vmatpush1.bf16.msra.mxu0 0
    %253 = vmatprep.subr.bf16.mxu0 0
    %254 = vmatpush1.bf16.msra.mxu0 0
    %255 = vmatprep.subr.bf16.mxu0 0
    %256 = vmatpush1.bf16.msra.mxu0 0
    %257 = vmatprep.subr.bf16.mxu0 0
    %258 = vmatpush1.bf16.msra.mxu0 0
    %259 = vmatprep.subr.bf16.mxu0 0
    %260 = vmatpush1.bf16.msra.mxu0 0
    %261 = vmatprep.subr.bf16.mxu0 0
    %262 = vmatpush1.bf16.msra.mxu0 0
    %263 = vmatprep.subr.bf16.mxu0 0
    %264 = vmatpush1.bf16.msra.mxu0 0
    %265 = vmatprep.subr.bf16.mxu0 0
    %266 = vmatpush1.bf16.msra.mxu0 0
    %267 = vmatprep.mubr.bf16.mxu0 0
    %268 = vmatmul.mubr.bf16.gmra.mrb[0].mxu0 %v233
    %v269 = vpop.f32.mrb[0].mxu0
    %v270 = vadd.f32 %v217, %v269
    %v271 = vpop.f32.mrb[0].mxu0
    %v272 = vpop.f32.mrb[0].mxu0
    %v273 = vpop.f32.mrb[0].mxu0
    %274 = vdwg.mxu0
    %v275 = vld [vmem:[#allocation13] sm:$0xf]
    %v276 = vld [vmem:[#allocation13 + $0x4] sm:$0xf]
    %v277 = vld [vmem:[#allocation13 + $0x8] sm:$0xf]
    %v278 = vld [vmem:[#allocation13 + $0xc] sm:$0xf]
    %v287 = vunpack.c.l.b16 %v200
    %v288 = vunpack.c.l.b16 %v201
    %v289 = vunpack.c.l.b16 %v202
    %v290 = vunpack.c.l.b16 %v203
    %v291 = vunpack.c.l.b16 %v204
    %v292 = vunpack.c.l.b16 %v205
    %v293 = vunpack.c.l.b16 %v206
    %v294 = vunpack.c.l.b16 %v207
    %v295 = vpack.c.b16 %v288, %v287
    %v296 = vpack.c.b16 %v290, %v289
    %v297 = vpack.c.b16 %v292, %v291
    %v298 = vpack.c.b16 %v294, %v293
    %v303 = vunpack.c.l.b16 %v275
    %v304 = vunpack.c.l.b16 %v276
    %v305 = vunpack.c.l.b16 %v277
    %v306 = vunpack.c.l.b16 %v278
    %v307 = vpack.c.b16 %v304, %v303
    %v308 = vpack.c.b16 %v306, %v305
    %v312 = vsel %vm231, %v295, 0
    %v315 = vsel %vm231, %v296, 0
    %v318 = vsel %vm231, %v297, 0
    %v321 = vsel %vm231, %v298, 0
    %323 = vmatprep.subr.bf16.mxu0 0
    %324 = vmatpush1.bf16.msra.mxu0 %v307
    %325 = vmatprep.subr.bf16.mxu0 0
    %326 = vmatpush1.bf16.msra.mxu0 %v308
    %327 = vmatprep.subr.bf16.mxu0 0
    %328 = vmatpush1.bf16.msra.mxu0 0
    %329 = vmatprep.subr.bf16.mxu0 0
    %330 = vmatpush1.bf16.msra.mxu0 0
    %331 = vmatprep.subr.bf16.mxu0 0
    %332 = vmatpush1.bf16.msra.mxu0 0
    %333 = vmatprep.subr.bf16.mxu0 0
    %334 = vmatpush1.bf16.msra.mxu0 0
    %335 = vmatprep.subr.bf16.mxu0 0
    %336 = vmatpush1.bf16.msra.mxu0 0
    %337 = vmatprep.subr.bf16.mxu0 0
    %338 = vmatpush1.bf16.msra.mxu0 0
    %339 = vmatprep.subr.bf16.mxu0 0
    %340 = vmatpush1.bf16.msra.mxu0 0
    %341 = vmatprep.subr.bf16.mxu0 0
    %342 = vmatpush1.bf16.msra.mxu0 0
    %343 = vmatprep.subr.bf16.mxu0 0
    %344 = vmatpush1.bf16.msra.mxu0 0
    %345 = vmatprep.subr.bf16.mxu0 0
    %346 = vmatpush1.bf16.msra.mxu0 0
    %347 = vmatprep.subr.bf16.mxu0 0
    %348 = vmatpush1.bf16.msra.mxu0 0
    %349 = vmatprep.subr.bf16.mxu0 0
    %350 = vmatpush1.bf16.msra.mxu0 0
    %351 = vmatprep.subr.bf16.mxu0 0
    %352 = vmatpush1.bf16.msra.mxu0 0
    %353 = vmatprep.subr.bf16.mxu0 0
    %354 = vmatpush1.bf16.msra.mxu0 0
    %355 = vmatprep.mubr.bf16.mxu0 0
    %356 = vmatmul.mubr.bf16.gmra.mrb[0].mxu0 %v312
    %v357 = vpop.f32.mrb[0].mxu0
    %v358 = vadd.f32 0.0, %v357
    %v359 = vpop.f32.mrb[0].mxu0
    %v360 = vpop.f32.mrb[0].mxu0
    %v361 = vadd.f32 0.0, %v360
    %v362 = vpop.f32.mrb[0].mxu0
    %363 = vmatprep.mubr.bf16.mxu0 0
    %364 = vmatmul.mubr.bf16.gmra.mrb[0].mxu0 %v315
    %v365 = vpop.f32.mrb[0].mxu0
    %v366 = vadd.f32 0.0, %v365
    %v367 = vpop.f32.mrb[0].mxu0
    %v368 = vpop.f32.mrb[0].mxu0
    %v369 = vadd.f32 0.0, %v368
    %v370 = vpop.f32.mrb[0].mxu0
    %371 = vmatprep.mubr.bf16.mxu0 0
    %372 = vmatmul.mubr.bf16.gmra.mrb[0].mxu0 %v318
    %v373 = vpop.f32.mrb[0].mxu0
    %v374 = vadd.f32 0.0, %v373
    %v375 = vpop.f32.mrb[0].mxu0
    %v376 = vpop.f32.mrb[0].mxu0
    %v377 = vadd.f32 0.0, %v376
    %v378 = vpop.f32.mrb[0].mxu0
    %379 = vmatprep.mubr.bf16.mxu0 0
    %380 = vmatmul.mubr.bf16.gmra.mrb[0].mxu0 %v321
    %v381 = vpop.f32.mrb[0].mxu0
    %v382 = vadd.f32 0.0, %v381
    %v383 = vpop.f32.mrb[0].mxu0
    %v384 = vpop.f32.mrb[0].mxu0
    %v385 = vadd.f32 0.0, %v384
    %v386 = vpop.f32.mrb[0].mxu0
    %387 = vdwg.mxu0
    %v389 = vcombine.high %v270, %v270
    %v391 = vunpack.c.l.s4 1966171168
    %v392 = vunpack.c.0.s8 %v391
    %v393 = vlaneseq
    %v394 = vshrl.u32 %v393, 7
    %v395 = vsub.s32 %v392, %v394
    %v396 = vrot.slane %v270, %v395
    %v398 = vunpack.c.l.s4 1966171168
    %v399 = vunpack.c.0.s8 %v398
    %v400 = vlaneseq
    %v401 = vshrl.u32 %v400, 7
    %v402 = vsub.s32 %v399, %v401
    %v403 = vrot.slane %v389, %v402
    %v404 = vcombine.high %v396, %v396
    %v405 = vcombine.high %v403, %v403
    %v407 = vunpack.c.l.s4 1966171168
    %v408 = vunpack.c.0.s8 %v407
    %v409 = vlaneseq
    %v410 = vshrl.u32 %v409, 7
    %v411 = vsub.s32 %v408, %v410
    %v412 = vrot.slane %v396, %v411
    %v414 = vunpack.c.l.s4 1966171168
    %v415 = vunpack.c.0.s8 %v414
    %v416 = vlaneseq
    %v417 = vshrl.u32 %v416, 7
    %v418 = vsub.s32 %v415, %v417
    %v419 = vrot.slane %v403, %v418
    %v421 = vunpack.c.l.s4 1966171168
    %v422 = vunpack.c.0.s8 %v421
    %v423 = vlaneseq
    %v424 = vshrl.u32 %v423, 7
    %v425 = vsub.s32 %v422, %v424
    %v426 = vrot.slane %v404, %v425
    %v428 = vunpack.c.l.s4 1966171168
    %v429 = vunpack.c.0.s8 %v428
    %v430 = vlaneseq
    %v431 = vshrl.u32 %v430, 7
    %v432 = vsub.s32 %v429, %v431
    %v433 = vrot.slane %v405, %v432
    %v434 = vcombine.high %v412, %v412
    %v435 = vcombine.high %v419, %v419
    %v436 = vcombine.high %v426, %v426
    %v437 = vcombine.high %v433, %v433
    %v438 = vlaneseq
    %v439 = vshrl.u32 %v438, 7
    %v440 = vsub.s32 0, %v439
    %v441 = vrot.slane %v412, %v440
    %v442 = vlaneseq
    %v443 = vshrl.u32 %v442, 7
    %v444 = vsub.s32 0, %v443
    %v445 = vrot.slane %v426, %v444
    %v446 = vlaneseq
    %v447 = vshrl.u32 %v446, 7
    %v448 = vsub.s32 0, %v447
    %v449 = vrot.slane %v434, %v448
    %v450 = vlaneseq
    %v451 = vshrl.u32 %v450, 7
    %v452 = vsub.s32 0, %v451
    %v453 = vrot.slane %v436, %v452
    %v454 = vlaneseq
    %v455 = vshrl.u32 %v454, 7
    %v456 = vsub.s32 0, %v455
    %v457 = vrot.slane %v419, %v456
    %v458 = vlaneseq
    %v459 = vshrl.u32 %v458, 7
    %v460 = vsub.s32 0, %v459
    %v461 = vrot.slane %v433, %v460
    %v462 = vlaneseq
    %v463 = vshrl.u32 %v462, 7
    %v464 = vsub.s32 0, %v463
    %v465 = vrot.slane %v435, %v464
    %v466 = vlaneseq
    %v467 = vshrl.u32 %v466, 7
    %v468 = vsub.s32 0, %v467
    %v469 = vrot.slane %v437, %v468
    %v478 = vadd.f32 %v358, %v441
    %v479 = vadd.f32 %v361, %v445
    %v480 = vadd.f32 %v366, %v449
    %v481 = vadd.f32 %v369, %v453
    %v482 = vadd.f32 %v374, %v457
    %v483 = vadd.f32 %v377, %v461
    %v484 = vadd.f32 %v382, %v465
    %v485 = vadd.f32 %v385, %v469
    %v486 = vtanh.pop %v478
    %v487 = vtanh.pop %v479
    %v488 = vtanh.pop %v480
    %v489 = vtanh.pop %v481
    %v490 = vtanh.pop %v482
    %v491 = vtanh.pop %v483
    %v492 = vtanh.pop %v484
    %v493 = vtanh.pop %v485
    %v494 = vld [vmem:[#allocation14] sm:$0x1]
    %v496 = vlaneseq
    %v497 = vshrl.u32 %v496, 7
    %v498 = vsub.s32 0, %v497
    %v499 = vrot.slane %v494, %v498
    %v501 = vmul.f32 %v486, %v499
    %v502 = vmul.f32 %v487, %v499
    %v503 = vmul.f32 %v488, %v499
    %v504 = vmul.f32 %v489, %v499
    %v505 = vmul.f32 %v490, %v499
    %v506 = vmul.f32 %v491, %v499
    %v507 = vmul.f32 %v492, %v499
    %v508 = vmul.f32 %v493, %v499
    %v509 = vsel %vm231, %v501, 0.0
    %510 = vadd.xlane.f32.xlu0 %v509
    %v511 = vpop.xlane.xlu0 %510
    %v512 = vsel %vm231, %v502, 0.0
    %513 = vadd.xlane.f32.xlu0 %v512
    %v514 = vpop.xlane.xlu0 %513
    %v515 = vsel %vm231, %v503, 0.0
    %516 = vadd.xlane.f32.xlu0 %v515
    %v517 = vpop.xlane.xlu0 %516
    %v518 = vsel %vm231, %v504, 0.0
    %519 = vadd.xlane.f32.xlu0 %v518
    %v520 = vpop.xlane.xlu0 %519
    %v521 = vsel %vm231, %v505, 0.0
    %522 = vadd.xlane.f32.xlu0 %v521
    %v523 = vpop.xlane.xlu0 %522
    %v524 = vsel %vm231, %v506, 0.0
    %525 = vadd.xlane.f32.xlu0 %v524
    %v526 = vpop.xlane.xlu0 %525
    %v527 = vsel %vm231, %v507, 0.0
    %528 = vadd.xlane.f32.xlu0 %v527
    %v529 = vpop.xlane.xlu0 %528
    %v530 = vsel %vm231, %v508, 0.0
    %531 = vadd.xlane.f32.xlu0 %v530
    %v532 = vpop.xlane.xlu0 %531
    %v541 = vlaneseq
    %v542 = vand.u32 %v541, 127
    %v543 = vlaneseq
    %v544 = vshrl.u32 %v543, 7
    %v545 = vsub.s32 %v542, %v544
    %v546 = vrot.slane %v511, %v545
    %v547 = vlaneseq
    %v548 = vshrl.u32 %v547, 7
    %v549 = vsub.s32 %v542, %v548
    %v550 = vrot.slane %v514, %v549
    %v551 = vlaneseq
    %v552 = vshrl.u32 %v551, 7
    %v553 = vsub.s32 %v542, %v552
    %v554 = vrot.slane %v517, %v553
    %v555 = vlaneseq
    %v556 = vshrl.u32 %v555, 7
    %v557 = vsub.s32 %v542, %v556
    %v558 = vrot.slane %v520, %v557
    %v559 = vlaneseq
    %v560 = vshrl.u32 %v559, 7
    %v561 = vsub.s32 %v542, %v560
    %v562 = vrot.slane %v523, %v561
    %v563 = vlaneseq
    %v564 = vshrl.u32 %v563, 7
    %v565 = vsub.s32 %v542, %v564
    %v566 = vrot.slane %v526, %v565
    %v567 = vlaneseq
    %v568 = vshrl.u32 %v567, 7
    %v569 = vsub.s32 %v542, %v568
    %v570 = vrot.slane %v529, %v569
    %v571 = vlaneseq
    %v572 = vshrl.u32 %v571, 7
    %v573 = vsub.s32 %v542, %v572
    %v574 = vrot.slane %v532, %v573
    %vm575 = vcmask 1041409
    %v576 = vsel %vm575, %v550, %v546
    %vm577 = vcmask 1042434
    %v578 = vsel %vm577, %v554, %v576
    %vm579 = vcmask 1043459
    %v580 = vsel %vm579, %v558, %v578
    %vm581 = vcmask 1044484
    %v582 = vsel %vm581, %v562, %v580
    %vm583 = vcmask 1045509
    %v584 = vsel %vm583, %v566, %v582
    %vm585 = vcmask 1046534
    %v586 = vsel %vm585, %v570, %v584
    %vm587 = vcmask 1047559
    %v588 = vsel %vm587, %v574, %v586
    %vm590 = vcmask 64512
    %v591 = vsel %vm590, %v588, -inf
    %592 = vmax.xlane.f32.xlu0 %v591
    %v593 = vpop.xlane.xlu0 %592
    %v595 = vlaneseq
    %v596 = vshrl.u32 %v595, 7
    %v597 = vsub.s32 0, %v596
    %v598 = vrot.slane %v593, %v597
    %v599 = vlaneseq
    %v600 = vshrl.u32 %v599, 7
    %v601 = vsub.s32 1, %v600
    %v602 = vrot.slane %v593, %v601
    %v603 = vlaneseq
    %v604 = vshrl.u32 %v603, 7
    %v605 = vsub.s32 2, %v604
    %v606 = vrot.slane %v593, %v605
    %v607 = vlaneseq
    %v608 = vshrl.u32 %v607, 7
    %v609 = vsub.s32 3, %v608
    %v610 = vrot.slane %v593, %v609
    %v611 = vlaneseq
    %v612 = vshrl.u32 %v611, 7
    %v613 = vsub.s32 4, %v612
    %v614 = vrot.slane %v593, %v613
    %v615 = vlaneseq
    %v616 = vshrl.u32 %v615, 7
    %v617 = vsub.s32 5, %v616
    %v618 = vrot.slane %v593, %v617
    %v619 = vlaneseq
    %v620 = vshrl.u32 %v619, 7
    %v621 = vsub.s32 6, %v620
    %v622 = vrot.slane %v593, %v621
    %v623 = vlaneseq
    %v624 = vshrl.u32 %v623, 7
    %v625 = vsub.s32 7, %v624
    %v626 = vrot.slane %v593, %v625
    %v635 = vsub.f32 %v511, %v598
    %v636 = vsub.f32 %v514, %v602
    %v637 = vsub.f32 %v517, %v606
    %v638 = vsub.f32 %v520, %v610
    %v639 = vsub.f32 %v523, %v614
    %v640 = vsub.f32 %v526, %v618
    %v641 = vsub.f32 %v529, %v622
    %v642 = vsub.f32 %v532, %v626
    %v643 = vmul.f32 %v635, 1.442695
    %v644 = vpow.pop %v643
    %v645 = vmul.f32 %v636, 1.442695
    %v646 = vpow.pop %v645
    %v647 = vmul.f32 %v637, 1.442695
    %v648 = vpow.pop %v647
    %v649 = vmul.f32 %v638, 1.442695
    %v650 = vpow.pop %v649
    %v651 = vmul.f32 %v639, 1.442695
    %v652 = vpow.pop %v651
    %v653 = vmul.f32 %v640, 1.442695
    %v654 = vpow.pop %v653
    %v655 = vmul.f32 %v641, 1.442695
    %v656 = vpow.pop %v655
    %v657 = vmul.f32 %v642, 1.442695
    %v658 = vpow.pop %v657
    %667 = vset.pattern.permute.xlu0 0
    %668 = vperm.xlu0 %667, %v644
    %v669 = vpop.permute.xlu0 %668
    %670 = vset.pattern.permute.xlu0 0
    %671 = vperm.xlu0 %670, %v646
    %v672 = vpop.permute.xlu0 %671
    %673 = vset.pattern.permute.xlu0 0
    %674 = vperm.xlu0 %673, %v648
    %v675 = vpop.permute.xlu0 %674
    %676 = vset.pattern.permute.xlu0 0
    %677 = vperm.xlu0 %676, %v650
    %v678 = vpop.permute.xlu0 %677
    %679 = vset.pattern.permute.xlu0 0
    %680 = vperm.xlu0 %679, %v652
    %v681 = vpop.permute.xlu0 %680
    %682 = vset.pattern.permute.xlu0 0
    %683 = vperm.xlu0 %682, %v654
    %v684 = vpop.permute.xlu0 %683
    %685 = vset.pattern.permute.xlu0 0
    %686 = vperm.xlu0 %685, %v656
    %v687 = vpop.permute.xlu0 %686
    %688 = vset.pattern.permute.xlu0 0
    %689 = vperm.xlu0 %688, %v658
    %v690 = vpop.permute.xlu0 %689
    %v691 = vlaneseq
    %v692 = vshrl.u32 %v691, 7
    %v693 = vsub.s32 %v542, %v692
    %v694 = vrot.slane %v669, %v693
    %v695 = vlaneseq
    %v696 = vshrl.u32 %v695, 7
    %v697 = vsub.s32 %v542, %v696
    %v698 = vrot.slane %v672, %v697
    %v699 = vlaneseq
    %v700 = vshrl.u32 %v699, 7
    %v701 = vsub.s32 %v542, %v700
    %v702 = vrot.slane %v675, %v701
    %v703 = vlaneseq
    %v704 = vshrl.u32 %v703, 7
    %v705 = vsub.s32 %v542, %v704
    %v706 = vrot.slane %v678, %v705
    %v707 = vlaneseq
    %v708 = vshrl.u32 %v707, 7
    %v709 = vsub.s32 %v542, %v708
    %v710 = vrot.slane %v681, %v709
    %v711 = vlaneseq
    %v712 = vshrl.u32 %v711, 7
    %v713 = vsub.s32 %v542, %v712
    %v714 = vrot.slane %v684, %v713
    %v715 = vlaneseq
    %v716 = vshrl.u32 %v715, 7
    %v717 = vsub.s32 %v542, %v716
    %v718 = vrot.slane %v687, %v717
    %v719 = vlaneseq
    %v720 = vshrl.u32 %v719, 7
    %v721 = vsub.s32 %v542, %v720
    %v722 = vrot.slane %v690, %v721
    %v723 = vsel %vm575, %v698, %v694
    %v724 = vsel %vm577, %v702, %v723
    %v725 = vsel %vm579, %v706, %v724
    %v726 = vsel %vm581, %v710, %v725
    %v727 = vsel %vm583, %v714, %v726
    %v728 = vsel %vm585, %v718, %v727
    %v729 = vsel %vm587, %v722, %v728
    %v731 = vsel %vm590, %v729, 0.0
    %732 = vadd.xlane.f32.xlu0 %v731
    %v733 = vpop.xlane.xlu0 %732
    %v735 = vlaneseq
    %v736 = vshrl.u32 %v735, 7
    %v737 = vsub.s32 0, %v736
    %v738 = vrot.slane %v733, %v737
    %v739 = vlaneseq
    %v740 = vshrl.u32 %v739, 7
    %v741 = vsub.s32 1, %v740
    %v742 = vrot.slane %v733, %v741
    %v743 = vlaneseq
    %v744 = vshrl.u32 %v743, 7
    %v745 = vsub.s32 2, %v744
    %v746 = vrot.slane %v733, %v745
    %v747 = vlaneseq
    %v748 = vshrl.u32 %v747, 7
    %v749 = vsub.s32 3, %v748
    %v750 = vrot.slane %v733, %v749
    %v751 = vlaneseq
    %v752 = vshrl.u32 %v751, 7
    %v753 = vsub.s32 4, %v752
    %v754 = vrot.slane %v733, %v753
    %v755 = vlaneseq
    %v756 = vshrl.u32 %v755, 7
    %v757 = vsub.s32 5, %v756
    %v758 = vrot.slane %v733, %v757
    %v759 = vlaneseq
    %v760 = vshrl.u32 %v759, 7
    %v761 = vsub.s32 6, %v760
    %v762 = vrot.slane %v733, %v761
    %v763 = vlaneseq
    %v764 = vshrl.u32 %v763, 7
    %v765 = vsub.s32 7, %v764
    %v766 = vrot.slane %v733, %v765
    %v775 = vrcp.pop %v738
    %v776 = vmul.f32 %v644, %v775
    %v777 = vrcp.pop %v742
    %v778 = vmul.f32 %v646, %v777
    %v779 = vrcp.pop %v746
    %v780 = vmul.f32 %v648, %v779
    %v781 = vrcp.pop %v750
    %v782 = vmul.f32 %v650, %v781
    %v783 = vrcp.pop %v754
    %v784 = vmul.f32 %v652, %v783
    %v785 = vrcp.pop %v758
    %v786 = vmul.f32 %v654, %v785
    %v787 = vrcp.pop %v762
    %v788 = vmul.f32 %v656, %v787
    %v789 = vrcp.pop %v766
    %v790 = vmul.f32 %v658, %v789
    %v791 = vunpack.c.l.bf16 %v200
    %v792 = vunpack.c.l.bf16 %v201
    %v793 = vunpack.c.l.bf16 %v202
    %v794 = vunpack.c.l.bf16 %v203
    %v795 = vunpack.c.l.bf16 %v204
    %v796 = vunpack.c.l.bf16 %v205
    %v797 = vunpack.c.l.bf16 %v206
    %v798 = vunpack.c.l.bf16 %v207
    %800 = vset.pattern.permute.xlu0 0
    %801 = vperm.xlu0 %800, %v776
    %v802 = vpop.permute.xlu0 %801
    %805 = vset.pattern.permute.xlu0 0
    %806 = vperm.xlu0 %805, %v778
    %v807 = vpop.permute.xlu0 %806
    %810 = vset.pattern.permute.xlu0 0
    %811 = vperm.xlu0 %810, %v780
    %v812 = vpop.permute.xlu0 %811
    %815 = vset.pattern.permute.xlu0 0
    %816 = vperm.xlu0 %815, %v782
    %v817 = vpop.permute.xlu0 %816
    %820 = vset.pattern.permute.xlu0 0
    %821 = vperm.xlu0 %820, %v784
    %v822 = vpop.permute.xlu0 %821
    %825 = vset.pattern.permute.xlu0 0
    %826 = vperm.xlu0 %825, %v786
    %v827 = vpop.permute.xlu0 %826
    %830 = vset.pattern.permute.xlu0 0
    %831 = vperm.xlu0 %830, %v788
    %v832 = vpop.permute.xlu0 %831
    %835 = vset.pattern.permute.xlu0 0
    %836 = vperm.xlu0 %835, %v790
    %v837 = vpop.permute.xlu0 %836
    %v839 = vmul.f32 %v802, %v791
    %v840 = vmul.f32 %v807, %v792
    %v841 = vmul.f32 %v812, %v793
    %v842 = vmul.f32 %v817, %v794
    %v843 = vmul.f32 %v822, %v795
    %v844 = vmul.f32 %v827, %v796
    %v845 = vmul.f32 %v832, %v797
    %v846 = vmul.f32 %v837, %v798
    %v847 = vsel %vm231, %v839, 0.0
    %v848 = vrot.slane %v847, 4
    %v849 = vadd.f32 %v847, %v848
    %v850 = vrot.slane %v849, 2
    %v851 = vadd.f32 %v849, %v850
    %v852 = vrot.slane %v851, 1
    %v853 = vadd.f32 %v851, %v852
    %v854 = vsel %vm231, %v840, 0.0
    %v855 = vrot.slane %v854, 4
    %v856 = vadd.f32 %v854, %v855
    %v857 = vrot.slane %v856, 2
    %v858 = vadd.f32 %v856, %v857
    %v859 = vrot.slane %v858, 1
    %v860 = vadd.f32 %v858, %v859
    %v861 = vsel %vm231, %v841, 0.0
    %v862 = vrot.slane %v861, 4
    %v863 = vadd.f32 %v861, %v862
    %v864 = vrot.slane %v863, 2
    %v865 = vadd.f32 %v863, %v864
    %v866 = vrot.slane %v865, 1
    %v867 = vadd.f32 %v865, %v866
    %v868 = vsel %vm231, %v842, 0.0
    %v869 = vrot.slane %v868, 4
    %v870 = vadd.f32 %v868, %v869
    %v871 = vrot.slane %v870, 2
    %v872 = vadd.f32 %v870, %v871
    %v873 = vrot.slane %v872, 1
    %v874 = vadd.f32 %v872, %v873
    %v875 = vsel %vm231, %v843, 0.0
    %v876 = vrot.slane %v875, 4
    %v877 = vadd.f32 %v875, %v876
    %v878 = vrot.slane %v877, 2
    %v879 = vadd.f32 %v877, %v878
    %v880 = vrot.slane %v879, 1
    %v881 = vadd.f32 %v879, %v880
    %v882 = vsel %vm231, %v844, 0.0
    %v883 = vrot.slane %v882, 4
    %v884 = vadd.f32 %v882, %v883
    %v885 = vrot.slane %v884, 2
    %v886 = vadd.f32 %v884, %v885
    %v887 = vrot.slane %v886, 1
    %v888 = vadd.f32 %v886, %v887
    %v889 = vsel %vm231, %v845, 0.0
    %v890 = vrot.slane %v889, 4
    %v891 = vadd.f32 %v889, %v890
    %v892 = vrot.slane %v891, 2
    %v893 = vadd.f32 %v891, %v892
    %v894 = vrot.slane %v893, 1
    %v895 = vadd.f32 %v893, %v894
    %v896 = vsel %vm231, %v846, 0.0
    %v897 = vrot.slane %v896, 4
    %v898 = vadd.f32 %v896, %v897
    %v899 = vrot.slane %v898, 2
    %v900 = vadd.f32 %v898, %v899
    %v901 = vrot.slane %v900, 1
    %v902 = vadd.f32 %v900, %v901
    %v903 = vpack.c.bf16 %v853, %v853
    %v904 = vpack.c.bf16 %v860, %v860
    %v905 = vpack.c.bf16 %v867, %v867
    %v906 = vpack.c.bf16 %v874, %v874
    %v907 = vpack.c.bf16 %v881, %v881
    %v908 = vpack.c.bf16 %v888, %v888
    %v909 = vpack.c.bf16 %v895, %v895
    %v910 = vpack.c.bf16 %v902, %v902
    %v911 = vld [vmem:[%s9] sm:$0xf]
    %v912 = vld [vmem:[%s9 + $0x4] sm:$0xf]
    %v913 = vld [vmem:[%s9 + $0x8] sm:$0xf]
    %v914 = vld [vmem:[%s9 + $0xc] sm:$0xf]
    %v915 = vld [vmem:[%s9 + $0x10] sm:$0xf]
    %v916 = vld [vmem:[%s9 + $0x14] sm:$0xf]
    %v917 = vld [vmem:[#allocation16] sm:$0xf]
    %v918 = vld [vmem:[#allocation16 + $0x4] sm:$0xf]
    %v919 = vld [vmem:[#allocation16 + $0x8] sm:$0xf]
    %v920 = vld [vmem:[#allocation16 + $0xc] sm:$0xf]
    %v929 = vunpack.c.l.b16 %v903
    %v930 = vunpack.c.l.b16 %v904
    %v931 = vunpack.c.l.b16 %v905
    %v932 = vunpack.c.l.b16 %v906
    %v933 = vunpack.c.l.b16 %v907
    %v934 = vunpack.c.l.b16 %v908
    %v935 = vunpack.c.l.b16 %v909
    %v936 = vunpack.c.l.b16 %v910
    %v937 = vsel %vm575, %v930, %v929
    %v938 = vsel %vm577, %v931, %v937
    %v939 = vsel %vm579, %v932, %v938
    %v940 = vsel %vm581, %v933, %v939
    %v941 = vsel %vm583, %v934, %v940
    %v942 = vsel %vm585, %v935, %v941
    %v943 = vsel %vm587, %v936, %v942
    %v944 = vpack.c.b16 %v943, %v943
    %v949 = vunpack.c.l.b16 %v917
    %v950 = vunpack.c.l.b16 %v918
    %v951 = vunpack.c.l.b16 %v919
    %v952 = vunpack.c.l.b16 %v920
    %v953 = vpack.c.b16 %v950, %v949
    %v954 = vpack.c.b16 %v952, %v951
    %v958 = vsel %vm231, %v944, 0
    %960 = vmatprep.subr.bf16.mxu0 0
    %961 = vmatpush1.bf16.msra.mxu0 %v953
    %962 = vmatprep.subr.bf16.mxu0 0
    %963 = vmatpush1.bf16.msra.mxu0 %v954
    %964 = vmatprep.subr.bf16.mxu0 0
    %965 = vmatpush1.bf16.msra.mxu0 0
    %966 = vmatprep.subr.bf16.mxu0 0
    %967 = vmatpush1.bf16.msra.mxu0 0
    %968 = vmatprep.subr.bf16.mxu0 0
    %969 = vmatpush1.bf16.msra.mxu0 0
    %970 = vmatprep.subr.bf16.mxu0 0
    %971 = vmatpush1.bf16.msra.mxu0 0
    %972 = vmatprep.subr.bf16.mxu0 0
    %973 = vmatpush1.bf16.msra.mxu0 0
    %974 = vmatprep.subr.bf16.mxu0 0
    %975 = vmatpush1.bf16.msra.mxu0 0
    %976 = vmatprep.subr.bf16.mxu0 0
    %977 = vmatpush1.bf16.msra.mxu0 0
    %978 = vmatprep.subr.bf16.mxu0 0
    %979 = vmatpush1.bf16.msra.mxu0 0
    %980 = vmatprep.subr.bf16.mxu0 0
    %981 = vmatpush1.bf16.msra.mxu0 0
    %982 = vmatprep.subr.bf16.mxu0 0
    %983 = vmatpush1.bf16.msra.mxu0 0
    %984 = vmatprep.subr.bf16.mxu0 0
    %985 = vmatpush1.bf16.msra.mxu0 0
    %986 = vmatprep.subr.bf16.mxu0 0
    %987 = vmatpush1.bf16.msra.mxu0 0
    %988 = vmatprep.subr.bf16.mxu0 0
    %989 = vmatpush1.bf16.msra.mxu0 0
    %990 = vmatprep.subr.bf16.mxu0 0
    %991 = vmatpush1.bf16.msra.mxu0 0
    %992 = vmatprep.mubr.bf16.mxu0 0
    %993 = vmatmul.mubr.bf16.gmra.mrb[0].mxu0 %v958
    %v994 = vpop.f32.mrb[0].mxu0
    %v995 = vadd.f32 0.0, %v994
    %v996 = vpop.f32.mrb[0].mxu0
    %v997 = vpop.f32.mrb[0].mxu0
    %v998 = vpop.f32.mrb[0].mxu0
    %999 = vdwg.mxu0
    %v1006 = vunpack.c.l.b16 %v911
    %v1007 = vunpack.c.l.b16 %v912
    %v1008 = vunpack.c.l.b16 %v913
    %v1009 = vunpack.c.l.b16 %v914
    %v1010 = vunpack.c.l.b16 %v915
    %v1011 = vunpack.c.l.b16 %v916
    %v1012 = vpack.c.b16 %v1007, %v1006
    %v1013 = vpack.c.b16 %v1009, %v1008
    %v1014 = vpack.c.b16 %v1011, %v1010
    %vm1018 = vcmask 392192
    %v1020 = vsel %vm1018, %v198, 0
    %1022 = vmatprep.subr.bf16.mxu0 0
    %1023 = vmatpush1.bf16.msra.mxu0 %v1012
    %1024 = vmatprep.subr.bf16.mxu0 0
    %1025 = vmatpush1.bf16.msra.mxu0 %v1013
    %1026 = vmatprep.subr.bf16.mxu0 0
    %1027 = vmatpush1.bf16.msra.mxu0 %v1014
    %1028 = vmatprep.subr.bf16.mxu0 0
    %1029 = vmatpush1.bf16.msra.mxu0 0
    %1030 = vmatprep.subr.bf16.mxu0 0
    %1031 = vmatpush1.bf16.msra.mxu0 0
    %1032 = vmatprep.subr.bf16.mxu0 0
    %1033 = vmatpush1.bf16.msra.mxu0 0
    %1034 = vmatprep.subr.bf16.mxu0 0
    %1035 = vmatpush1.bf16.msra.mxu0 0
    %1036 = vmatprep.subr.bf16.mxu0 0
    %1037 = vmatpush1.bf16.msra.mxu0 0
    %1038 = vmatprep.subr.bf16.mxu0 0
    %1039 = vmatpush1.bf16.msra.mxu0 0
    %1040 = vmatprep.subr.bf16.mxu0 0
    %1041 = vmatpush1.bf16.msra.mxu0 0
    %1042 = vmatprep.subr.bf16.mxu0 0
    %1043 = vmatpush1.bf16.msra.mxu0 0
    %1044 = vmatprep.subr.bf16.mxu0 0
    %1045 = vmatpush1.bf16.msra.mxu0 0
    %1046 = vmatprep.subr.bf16.mxu0 0
    %1047 = vmatpush1.bf16.msra.mxu0 0
    %1048 = vmatprep.subr.bf16.mxu0 0
    %1049 = vmatpush1.bf16.msra.mxu0 0
    %1050 = vmatprep.subr.bf16.mxu0 0
    %1051 = vmatpush1.bf16.msra.mxu0 0
    %1052 = vmatprep.subr.bf16.mxu0 0
    %1053 = vmatpush1.bf16.msra.mxu0 0
    %1054 = vmatprep.mubr.bf16.mxu0 0
    %1055 = vmatmul.mubr.bf16.gmra.mrb[0].mxu0 %v1020
    %v1056 = vpop.f32.mrb[0].mxu0
    %v1057 = vadd.f32 %v995, %v1056
    %v1058 = vpop.f32.mrb[0].mxu0
    %v1059 = vpop.f32.mrb[0].mxu0
    %v1060 = vpop.f32.mrb[0].mxu0
    %1061 = vdwg.mxu0
    %v1062 = vld [vmem:[#allocation17] sm:$0x1]
    %v1064 = vlaneseq
    %v1065 = vshrl.u32 %v1064, 7
    %v1066 = vsub.s32 0, %v1065
    %v1067 = vrot.slane %v1062, %v1066
    %v1069 = vadd.f32 %v1057, %v1067
    %v1070 = vxor.u32 %v1069, 2147483648
    %v1071 = vmul.f32 %v1070, 1.442695
    %v1072 = vpow.pop %v1071
    %v1073 = vadd.f32 %v1072, 1.0
    %v1074 = vrcp.pop %v1073
    %v1075 = vmul.f32 1.0, %v1074
    %v1076 = vtanh.pop %v1069
    %1078 = vrot.lane.b32.xlu0 %v199, 32
    %v1079 = vpop.permute.xlu0 %1078
    %v1081 = vmul.f32 %v1075, %v1079
    %1083 = vrot.lane.b32.xlu0 %v1076, 64
    %v1084 = vpop.permute.xlu0 %1083
    %v1086 = vmul.f32 %v1075, %v1084
    %1088 = vrot.lane.b32.xlu0 %v1086, 32
    %v1089 = vpop.permute.xlu0 %1088
    %v1091 = vadd.f32 %v1081, %v1089
    %v1092 = vtanh.pop %v1091
    %1094 = vrot.lane.b32.xlu0 %v1092, 64
    %v1095 = vpop.permute.xlu0 %1094
    %v1097 = vmul.f32 %v1075, %v1095
    %v1098 = vpack.c.bf16 %v1097, %v1097
    %v1099 = vld [vmem:[%s12] sm:$0xf]
    %v1100 = vld [vmem:[%s12 + $0x4] sm:$0xf]
    %v1101 = vld [vmem:[%s12 + $0x8] sm:$0xf]
    %v1102 = vld [vmem:[%s12 + $0xc] sm:$0xf]
    %v1103 = vld [vmem:[#allocation19] sm:$0xf]
    %v1104 = vld [vmem:[#allocation19 + $0x4] sm:$0xf]
    %v1105 = vld [vmem:[#allocation19 + $0x8] sm:$0xf]
    %v1106 = vld [vmem:[#allocation19 + $0xc] sm:$0xf]
    %v1111 = vunpack.c.l.b16 %v1103
    %v1112 = vunpack.c.l.b16 %v1104
    %v1113 = vunpack.c.l.b16 %v1105
    %v1114 = vunpack.c.l.b16 %v1106
    %v1115 = vpack.c.b16 %v1112, %v1111
    %v1116 = vpack.c.b16 %v1114, %v1113
    %1119 = vmatprep.subr.bf16.mxu0 0
    %1120 = vmatpush1.bf16.msra.mxu0 %v1115
    %1121 = vmatprep.subr.bf16.mxu0 0
    %1122 = vmatpush1.bf16.msra.mxu0 %v1116
    %1123 = vmatprep.subr.bf16.mxu0 0
    %1124 = vmatpush1.bf16.msra.mxu0 0
    %1125 = vmatprep.subr.bf16.mxu0 0
    %1126 = vmatpush1.bf16.msra.mxu0 0
    %1127 = vmatprep.subr.bf16.mxu0 0
    %1128 = vmatpush1.bf16.msra.mxu0 0
    %1129 = vmatprep.subr.bf16.mxu0 0
    %1130 = vmatpush1.bf16.msra.mxu0 0
    %1131 = vmatprep.subr.bf16.mxu0 0
    %1132 = vmatpush1.bf16.msra.mxu0 0
    %1133 = vmatprep.subr.bf16.mxu0 0
    %1134 = vmatpush1.bf16.msra.mxu0 0
    %1135 = vmatprep.subr.bf16.mxu0 0
    %1136 = vmatpush1.bf16.msra.mxu0 0
    %1137 = vmatprep.subr.bf16.mxu0 0
    %1138 = vmatpush1.bf16.msra.mxu0 0
    %1139 = vmatprep.subr.bf16.mxu0 0
    %1140 = vmatpush1.bf16.msra.mxu0 0
    %1141 = vmatprep.subr.bf16.mxu0 0
    %1142 = vmatpush1.bf16.msra.mxu0 0
    %1143 = vmatprep.subr.bf16.mxu0 0
    %1144 = vmatpush1.bf16.msra.mxu0 0
    %1145 = vmatprep.subr.bf16.mxu0 0
    %1146 = vmatpush1.bf16.msra.mxu0 0
    %1147 = vmatprep.subr.bf16.mxu0 0
    %1148 = vmatpush1.bf16.msra.mxu0 0
    %1149 = vmatprep.subr.bf16.mxu0 0
    %1150 = vmatpush1.bf16.msra.mxu0 0
    %1151 = vmatprep.mubr.bf16.mxu0 0
    %1152 = vmatmul.mubr.bf16.gmra.mrb[0].mxu0 %v958
    %v1153 = vpop.f32.mrb[0].mxu0
    %v1154 = vadd.f32 0.0, %v1153
    %v1155 = vpop.f32.mrb[0].mxu0
    %v1156 = vpop.f32.mrb[0].mxu0
    %v1157 = vpop.f32.mrb[0].mxu0
    %1158 = vdwg.mxu0
    %1160 = vrot.lane.b32.xlu0 %v1098, 32
    %v1161 = vpop.permute.xlu0 %1160
    %v1166 = vunpack.c.l.b16 %v1099
    %v1167 = vunpack.c.l.b16 %v1100
    %v1168 = vunpack.c.l.b16 %v1101
    %v1169 = vunpack.c.l.b16 %v1102
    %v1170 = vpack.c.b16 %v1167, %v1166
    %v1171 = vpack.c.b16 %v1169, %v1168
    %v1175 = vsel %vm231, %v1161, 0
    %1177 = vmatprep.subr.bf16.mxu0 0
    %1178 = vmatpush1.bf16.msra.mxu0 %v1170
    %1179 = vmatprep.subr.bf16.mxu0 0
    %1180 = vmatpush1.bf16.msra.mxu0 %v1171
    %1181 = vmatprep.subr.bf16.mxu0 0
    %1182 = vmatpush1.bf16.msra.mxu0 0
    %1183 = vmatprep.subr.bf16.mxu0 0
    %1184 = vmatpush1.bf16.msra.mxu0 0
    %1185 = vmatprep.subr.bf16.mxu0 0
    %1186 = vmatpush1.bf16.msra.mxu0 0
    %1187 = vmatprep.subr.bf16.mxu0 0
    %1188 = vmatpush1.bf16.msra.mxu0 0
    %1189 = vmatprep.subr.bf16.mxu0 0
    %1190 = vmatpush1.bf16.msra.mxu0 0
    %1191 = vmatprep.subr.bf16.mxu0 0
    %1192 = vmatpush1.bf16.msra.mxu0 0
    %1193 = vmatprep.subr.bf16.mxu0 0
    %1194 = vmatpush1.bf16.msra.mxu0 0
    %1195 = vmatprep.subr.bf16.mxu0 0
    %1196 = vmatpush1.bf16.msra.mxu0 0
    %1197 = vmatprep.subr.bf16.mxu0 0
    %1198 = vmatpush1.bf16.msra.mxu0 0
    %1199 = vmatprep.subr.bf16.mxu0 0
    %1200 = vmatpush1.bf16.msra.mxu0 0
    %1201 = vmatprep.subr.bf16.mxu0 0
    %1202 = vmatpush1.bf16.msra.mxu0 0
    %1203 = vmatprep.subr.bf16.mxu0 0
    %1204 = vmatpush1.bf16.msra.mxu0 0
    %1205 = vmatprep.subr.bf16.mxu0 0
    %1206 = vmatpush1.bf16.msra.mxu0 0
    %1207 = vmatprep.subr.bf16.mxu0 0
    %1208 = vmatpush1.bf16.msra.mxu0 0
    %1209 = vmatprep.mubr.bf16.mxu0 0
    %1210 = vmatmul.mubr.bf16.gmra.mrb[0].mxu0 %v1175
    %v1211 = vpop.f32.mrb[0].mxu0
    %v1212 = vadd.f32 %v1154, %v1211
    %v1213 = vpop.f32.mrb[0].mxu0
    %v1214 = vpop.f32.mrb[0].mxu0
    %v1215 = vpop.f32.mrb[0].mxu0
    %1216 = vdwg.mxu0
    %v1217 = vld [vmem:[%s14] sm:$0xf]
    %v1218 = vld [vmem:[%s14 + $0x4] sm:$0xf]
    %v1221 = vunpack.c.l.b16 %v1217
    %v1222 = vunpack.c.l.b16 %v1218
    %v1223 = vpack.c.b16 %v1222, %v1221
    %vm1225 = vcmask 130048
    %v1227 = vsel %vm1225, %v196, 0
    %1229 = vmatprep.subr.bf16.mxu0 0
    %1230 = vmatpush1.bf16.msra.mxu0 %v1223
    %1231 = vmatprep.subr.bf16.mxu0 0
    %1232 = vmatpush1.bf16.msra.mxu0 0
    %1233 = vmatprep.subr.bf16.mxu0 0
    %1234 = vmatpush1.bf16.msra.mxu0 0
    %1235 = vmatprep.subr.bf16.mxu0 0
    %1236 = vmatpush1.bf16.msra.mxu0 0
    %1237 = vmatprep.subr.bf16.mxu0 0
    %1238 = vmatpush1.bf16.msra.mxu0 0
    %1239 = vmatprep.subr.bf16.mxu0 0
    %1240 = vmatpush1.bf16.msra.mxu0 0
    %1241 = vmatprep.subr.bf16.mxu0 0
    %1242 = vmatpush1.bf16.msra.mxu0 0
    %1243 = vmatprep.subr.bf16.mxu0 0
    %1244 = vmatpush1.bf16.msra.mxu0 0
    %1245 = vmatprep.subr.bf16.mxu0 0
    %1246 = vmatpush1.bf16.msra.mxu0 0
    %1247 = vmatprep.subr.bf16.mxu0 0
    %1248 = vmatpush1.bf16.msra.mxu0 0
    %1249 = vmatprep.subr.bf16.mxu0 0
    %1250 = vmatpush1.bf16.msra.mxu0 0
    %1251 = vmatprep.subr.bf16.mxu0 0
    %1252 = vmatpush1.bf16.msra.mxu0 0
    %1253 = vmatprep.subr.bf16.mxu0 0
    %1254 = vmatpush1.bf16.msra.mxu0 0
    %1255 = vmatprep.subr.bf16.mxu0 0
    %1256 = vmatpush1.bf16.msra.mxu0 0
    %1257 = vmatprep.subr.bf16.mxu0 0
    %1258 = vmatpush1.bf16.msra.mxu0 0
    %1259 = vmatprep.subr.bf16.mxu0 0
    %1260 = vmatpush1.bf16.msra.mxu0 0
    %1261 = vmatprep.mubr.bf16.mxu0 0
    %1262 = vmatmul.mubr.bf16.gmra.mrb[0].mxu0 %v1227
    %v1263 = vpop.f32.mrb[0].mxu0
    %v1264 = vadd.f32 0.0, %v1263
    %v1265 = vpop.f32.mrb[0].mxu0
    %v1266 = vpop.f32.mrb[0].mxu0
    %v1267 = vpop.f32.mrb[0].mxu0
    %1268 = vdwg.mxu0
    %v1269 = vadd.f32 %v1212, %v1264
    %v1270 = vld [vmem:[%s15] sm:$0x1]
    %v1272 = vlaneseq
    %v1273 = vshrl.u32 %v1272, 7
    %v1274 = vsub.s32 0, %v1273
    %v1275 = vrot.slane %v1270, %v1274
    %v1277 = vadd.f32 %v1269, %v1275
    %1278 = vst.msk [vmem:[#allocation20] sm:$0xff] %vm231, %v1277
    %1280 = vrot.lane.b32.xlu0 %v1097, 32
    %v1281 = vpop.permute.xlu0 %1280
    %1283 = vst.msk [vmem:[#allocation21] sm:$0xff] %vm231, %v1281
    %1285 = vrot.lane.b32.xlu0 %v1091, 96
    %v1286 = vpop.permute.xlu0 %1285
    %1288 = vst.msk [vmem:[#allocation23] sm:$0xff] %vm231, %v1286
    // Predicated region
    $region110: #{tpu_custom_call.1} parent=1 // pred_check
      _
    $region111: #{tpu_custom_call.1} parent=1 // pred_check_branch
      %1290 = sbr.rel (0) target = $region113
    $region112: #{tpu_custom_call.1} parent=1 // pred_region
      %s1292 = ssub.s32 128, 128
      %1293 = vsyncadd [#allocation4], %s1292
      %s1295 = sshll.u32 [#allocation20], 4
      %s1296 = int_to_ptr.vmem [resolvable:$true] %s1295
      %1298 = dma.vmem_to_hbm [thread:$0]  %s1296, 128, %s16, [#allocation4]
    $region113: #{tpu_custom_call.1} parent=1 // pred_fallthru
      _
    // Predicated region
    $region114: #{tpu_custom_call.1} parent=1 // pred_check
      _
    $region115: #{tpu_custom_call.1} parent=1 // pred_check_branch
      %1300 = sbr.rel (0) target = $region117
    $region116: #{tpu_custom_call.1} parent=1 // pred_region
      %s1302 = ssub.s32 128, 128
      %1303 = vsyncadd [#allocation22], %s1302
      %s1305 = sshll.u32 [#allocation21], 4
      %s1306 = int_to_ptr.vmem [resolvable:$true] %s1305
      %1308 = dma.vmem_to_hbm [thread:$0]  %s1306, 128, %s17, [#allocation22]
    $region117: #{tpu_custom_call.1} parent=1 // pred_fallthru
      _
    // Predicated region
    $region118: #{tpu_custom_call.1} parent=1 // pred_check
      _
    $region119: #{tpu_custom_call.1} parent=1 // pred_check_branch
      %1310 = sbr.rel (0) target = $region121
    $region120: #{tpu_custom_call.1} parent=1 // pred_region
      %s1312 = ssub.s32 128, 128
      %1313 = vsyncadd [#allocation22], %s1312
      %s1315 = sshll.u32 [#allocation23], 4
      %s1316 = int_to_ptr.vmem [resolvable:$true] %s1315
      %1318 = dma.vmem_to_hbm [thread:$0]  %s1316, 128, %s18, [#allocation22]
    $region121: #{tpu_custom_call.1} parent=1 // pred_fallthru
      _
    // Predicated region
    $region122: #{tpu_custom_call.1} parent=1 // pred_check
      _
    $region123: #{tpu_custom_call.1} parent=1 // pred_check_branch
      %1320 = sbr.rel (0) target = $region125
    $region124: #{tpu_custom_call.1} parent=1 // pred_region
      %1321 = dma.done [#allocation4], 128
    $region125: #{tpu_custom_call.1} parent=1 // pred_fallthru
      _
    // Predicated region
    $region126: #{tpu_custom_call.1} parent=1 // pred_check
      _
    $region127: #{tpu_custom_call.1} parent=1 // pred_check_branch
      %1323 = sbr.rel (0) target = $region129
    $region128: #{tpu_custom_call.1} parent=1 // pred_region
      %1324 = dma.done [#allocation22], 128
    $region129: #{tpu_custom_call.1} parent=1 // pred_fallthru
      _
    // Predicated region
    $region130: #{tpu_custom_call.1} parent=1 // pred_check
      _
    $region131: #{tpu_custom_call.1} parent=1 // pred_check_branch
      %1326 = sbr.rel (0) target = $region133
    $region132: #{tpu_custom_call.1} parent=1 // pred_region
      %1327 = dma.done [#allocation22], 128
    $region133: #{tpu_custom_call.1} parent=1 // pred_fallthru
      _
    %1328 = vsyncpa [#allocation3], 1
    %1329 = vsyncpa [#allocation6], 1
    %1330 = vsyncpa [#allocation9], 1
    %1331 = vsyncpa [#allocation12], 1
    %1332 = vsyncpa [#allocation15], 1
    %1333 = vsyncpa [#allocation18], 1
    %1334 = vsyncpa [#allocation4], 1
    %1335 = vsyncpa [#allocation22], 1

</llo_original>
